<compile_context>
chip_gen: v6e
topology: v6e:2x2x1
jax: 0.10.0
libtpu: 0.0.40
codegen_flags: <defaults>
</compile_context>

<pallas_src>
import jax
import jax.numpy as jnp
from jax.experimental import pallas as pl
from jax.experimental.pallas import tpu as pltpu

BN_EPS = 1e-5


def _vmem_limit_bytes():
    """Per-generation VMEM budget (v5e/v6e: 128 MiB, v7x: 64 MiB per TensorCore)."""
    cap = None
    try:
        cap = getattr(pltpu.get_tpu_info(), "vmem_capacity_bytes", None)
    except Exception:
        cap = None
    if not cap:
        cap = 64 * 1024 * 1024
    return int(min(cap * 3 // 4, 100 * 1024 * 1024))


def _make_phase1_kernel(*, bt, h, w, ho, wo, c_in, c_out, stride, use_1x1conv):
    """conv1 (+ optional 1x1 projection shortcut) + per-tile partial BN1 stats."""
    mb = bt * ho * wo

    def kernel(*refs):
        refs = list(refs)
        in_ref = refs.pop(0)            # x (stride 1) or host-built tap matrix (strided)
        w1_ref = refs.pop(0)
        if use_1x1conv:
            w3_ref = refs.pop(0)
            b3_ref = refs.pop(0)
        acc1_ref = refs.pop(0)
        st1_ref = refs.pop(0)
        if use_1x1conv:
            sc_ref = refs.pop(0)
        if stride == 1:
            xpad_ref = refs.pop(0)

        if stride == 1:
            # In-kernel zero padding: zero only the 1-wide halo, then copy the interior.
            xpad_ref[:, 0:1, :, :] = jnp.zeros((bt, 1, w + 2, c_in), jnp.float32)
            xpad_ref[:, h + 1:h + 2, :, :] = jnp.zeros((bt, 1, w + 2, c_in), jnp.float32)
            xpad_ref[:, 1:h + 1, 0:1, :] = jnp.zeros((bt, h, 1, c_in), jnp.float32)
            xpad_ref[:, 1:h + 1, w + 1:w + 2, :] = jnp.zeros((bt, h, 1, c_in), jnp.float32)
            xpad_ref[:, 1:h + 1, 1:w + 1, :] = in_ref[...]
            # 9 conv taps sliced from the padded scratch, cast bf16 per tap (single
            # bf16 materialization of the (mb, 9*Cin) matrix straight into the MXU).
            taps = [xpad_ref[:, kh:kh + ho, kw:kw + wo, :]
                    .astype(jnp.bfloat16).reshape(mb, c_in)
                    for kh in range(3) for kw in range(3)]
            p1 = jnp.concatenate(taps, axis=-1)                 # (mb, 9*c_in) bf16
            center = taps[4]                                    # == x (shortcut input)
        else:
            p1 = in_ref[...]                                    # (mb, 9*c_in) bf16
            center = p1[:, 4 * c_in:5 * c_in]                   # == x[::s, ::s]

        # conv1: single deep-K bf16 MXU matmul, f32 accumulation.  Bias b1 dropped
        # (a per-channel constant cancels exactly through the batch-statistic BN1).
        acc = jnp.dot(p1, w1_ref[...], preferred_element_type=jnp.float32)
        acc1_ref[...] = acc.reshape(bt, ho, wo, c_out)

        # Per-tile partial BN1 statistics (sum / sum-of-squares), combined on the host.
        # TODO(synk): sum/sumsq is cancellation-prone for |mean| >> std; a shifted /
        #   Welford-style accumulation is safer when tiles get large.
        st1_ref[...] = jnp.concatenate(
            [jnp.sum(acc, axis=0, keepdims=True),
             jnp.sum(acc * acc, axis=0, keepdims=True)], axis=0).reshape(1, 2, c_out)

        if use_1x1conv:
            sc = jnp.dot(center, w3_ref[...],
                         preferred_element_type=jnp.float32) + b3_ref[...]
            sc_ref[...] = sc.reshape(bt, ho, wo, c_out)

    return kernel


def _make_phase2_kernel(*, bt, ho, wo, c_out):
    """BN1 folded affine + ReLU -> conv2 + per-tile partial BN2 stats."""
    mb = bt * ho * wo

    def kernel(acc1_ref, s1_ref, t1_ref, w2_ref, acc2_ref, st2_ref, ypad_ref):
        # BN1 as a per-channel affine (scale/shift from the cross-tile stats) + ReLU.
        y = jnp.maximum(acc1_ref[...].reshape(mb, c_out) * s1_ref[...] + t1_ref[...],
                        0.0)

        # Stage conv2 input: zero only the 1-wide halo, write the interior.
        ypad_ref[:, 0:1, :, :] = jnp.zeros((bt, 1, wo + 2, c_out), jnp.float32)
        ypad_ref[:, ho + 1:ho + 2, :, :] = jnp.zeros((bt, 1, wo + 2, c_out), jnp.float32)
        ypad_ref[:, 1:ho + 1, 0:1, :] = jnp.zeros((bt, ho, 1, c_out), jnp.float32)
        ypad_ref[:, 1:ho + 1, wo + 1:wo + 2, :] = jnp.zeros((bt, ho, 1, c_out), jnp.float32)
        ypad_ref[:, 1:ho + 1, 1:wo + 1, :] = y.reshape(bt, ho, wo, c_out)

        # conv2: 9 taps from the scratch, bf16 per tap, one deep-K MXU matmul.
        # Bias b2 dropped (cancels through batch-statistic BN2).
        taps = [ypad_ref[:, kh:kh + ho, kw:kw + wo, :]
                .astype(jnp.bfloat16).reshape(mb, c_out)
                for kh in range(3) for kw in range(3)]
        p2 = jnp.concatenate(taps, axis=-1)                     # (mb, 9*c_out) bf16
        acc2 = jnp.dot(p2, w2_ref[...], preferred_element_type=jnp.float32)
        acc2_ref[...] = acc2.reshape(bt, ho, wo, c_out)

        st2_ref[...] = jnp.concatenate(
            [jnp.sum(acc2, axis=0, keepdims=True),
             jnp.sum(acc2 * acc2, axis=0, keepdims=True)], axis=0).reshape(1, 2, c_out)

    return kernel


def _make_phase3_kernel(*, c_out):
    """BN2 folded affine + residual add + ReLU."""
    def kernel(acc2_ref, sc_ref, s2_ref, t2_ref, out_ref):
        s2 = s2_ref[...].reshape(1, 1, 1, c_out)
        t2 = t2_ref[...].reshape(1, 1, 1, c_out)
        out_ref[...] = jnp.maximum(acc2_ref[...] * s2 + t2 + sc_ref[...], 0.0)
    return kernel


def _fold_bn(stats, m, gamma, beta):
    """Combine per-tile (sum, sumsq) partials into a per-channel affine (scale, shift)."""
    s = jnp.sum(stats[:, 0, :], axis=0)
    q = jnp.sum(stats[:, 1, :], axis=0)
    mean = s / m
    var = jnp.maximum(q / m - mean * mean, 0.0)
    scale = gamma * jax.lax.rsqrt(var + BN_EPS)
    shift = beta - mean * scale
    return scale.reshape(1, -1).astype(jnp.float32), shift.reshape(1, -1).astype(jnp.float32)


def basic_block_forward(x_nchw, params, *, use_1x1conv, strides, rows_per_tile=256):
    """Pallas implementation. x_nchw: (N, Cin, H, W) f32; returns (N, Cout, Ho, Wo)."""
    w1, b1, g1, be1, w2, b2, g2, be2, w3, b3 = params
    del b1, b2   # cancelled exactly by the batch-statistic BatchNorms that follow
    n, c_in, h, w = x_nchw.shape
    c_out = w1.shape[0]
    s = strides
    if not use_1x1conv and (s != 1 or c_in != c_out):
        raise ValueError("identity shortcut requires strides == 1 and c_in == c_out")

    ho = (h + 2 - 3) // s + 1
    wo = (w + 2 - 3) // s + 1
    m = n * ho * wo

    # NHWC inside the kernels (wrapper transposes kept only for the NCHW interface).
    x = jnp.transpose(x_nchw, (0, 2, 3, 1)).astype(jnp.float32)

    # Batch-tile size: aim for ~rows_per_tile output rows per grid step (MXU-friendly),
    # while dividing the batch.
    bt = max(1, min(n, rows_per_tile // max(1, ho * wo)))
    while n % bt:
        bt -= 1
    nb = n // bt
    mb = bt * ho * wo

    # PyTorch (Cout, Cin, kh, kw) -> (9*Cin, Cout) tap-major, bf16 for the MXU.
    w1m = jnp.transpose(w1, (2, 3, 1, 0)).reshape(9 * c_in, c_out).astype(jnp.bfloat16)
    w2m = jnp.transpose(w2, (2, 3, 1, 0)).reshape(9 * c_out, c_out).astype(jnp.bfloat16)

    cparams = pltpu.CompilerParams(dimension_semantics=("parallel",),
                                   vmem_limit_bytes=_vmem_limit_bytes())

    # ---------------- phase 1: conv1 (+ projection shortcut) + BN1 partial stats ----
    if s == 1:
        conv1_in = x                                             # un-padded; kernel pads
        conv1_spec = pl.BlockSpec((bt, h, w, c_in), lambda b: (b, 0, 0, 0))
        scratch1 = [pltpu.VMEM((bt, h + 2, w + 2, c_in), jnp.float32)]
    else:
        # Strided conv: host builds ONE concatenated (M, 9*Cin) bf16 tap matrix
        # (9/s^2 of x); rows are batch-major so each batch tile owns a contiguous slab.
        x_pad = jnp.pad(x, ((0, 0), (1, 1), (1, 1), (0, 0))).astype(jnp.bfloat16)
        taps = [x_pad[:, kh:kh + s * (ho - 1) + 1:s, kw:kw + s * (wo - 1) + 1:s, :]
                .reshape(m, c_in) for kh in range(3) for kw in range(3)]
        conv1_in = jnp.concatenate(taps, axis=-1)                # (m, 9*c_in) bf16
        conv1_spec = pl.BlockSpec((mb, 9 * c_in), lambda b: (b, 0))
        scratch1 = []

    p1_ops = [conv1_in, w1m]
    p1_in_specs = [conv1_spec, pl.BlockSpec((9 * c_in, c_out), lambda b: (0, 0))]
    p1_out_shape = [jax.ShapeDtypeStruct((n, ho, wo, c_out), jnp.float32),   # acc1
                    jax.ShapeDtypeStruct((nb, 2, c_out), jnp.float32)]       # stats1
    p1_out_specs = [pl.BlockSpec((bt, ho, wo, c_out), lambda b: (b, 0, 0, 0)),
                    pl.BlockSpec((1, 2, c_out), lambda b: (b, 0, 0))]
    if use_1x1conv:
        w3m = jnp.transpose(w3, (2, 3, 1, 0)).reshape(c_in, c_out).astype(jnp.bfloat16)
        p1_ops += [w3m, b3.reshape(1, c_out).astype(jnp.float32)]
        p1_in_specs += [pl.BlockSpec((c_in, c_out), lambda b: (0, 0)),
                        pl.BlockSpec((1, c_out), lambda b: (0, 0))]
        p1_out_shape += [jax.ShapeDtypeStruct((n, ho, wo, c_out), jnp.float32)]  # sc
        p1_out_specs += [pl.BlockSpec((bt, ho, wo, c_out), lambda b: (b, 0, 0, 0))]

    flops1 = 2 * m * (9 * c_in) * c_out + (2 * m * c_in * c_out if use_1x1conv else 0)
    res1 = pl.pallas_call(
        _make_phase1_kernel(bt=bt, h=h, w=w, ho=ho, wo=wo, c_in=c_in, c_out=c_out,
                            stride=s, use_1x1conv=use_1x1conv),
        grid=(nb,),
        out_shape=tuple(p1_out_shape),
        in_specs=p1_in_specs,
        out_specs=tuple(p1_out_specs),
        scratch_shapes=scratch1,
        compiler_params=cparams,
        cost_estimate=pl.CostEstimate(
            flops=flops1, transcendentals=0,
            bytes_accessed=int(conv1_in.size * conv1_in.dtype.itemsize
                               + w1m.size * 2 + m * c_out * 4)),
    )(*p1_ops)
    acc1, stats1 = res1[0], res1[1]
    sc = res1[2] if use_1x1conv else x        # identity shortcut: x itself (f32, exact)

    scale1, shift1 = _fold_bn(stats1, m, g1, be1)

    # ---------------- phase 2: BN1 affine + ReLU -> conv2 + BN2 partial stats --------
    acc2, stats2 = pl.pallas_call(
        _make_phase2_kernel(bt=bt, ho=ho, wo=wo, c_out=c_out),
        grid=(nb,),
        out_shape=(jax.ShapeDtypeStruct((n, ho, wo, c_out), jnp.float32),
                   jax.ShapeDtypeStruct((nb, 2, c_out), jnp.float32)),
        in_specs=[pl.BlockSpec((bt, ho, wo, c_out), lambda b: (b, 0, 0, 0)),
                  pl.BlockSpec((1, c_out), lambda b: (0, 0)),
                  pl.BlockSpec((1, c_out), lambda b: (0, 0)),
                  pl.BlockSpec((9 * c_out, c_out), lambda b: (0, 0))],
        out_specs=(pl.BlockSpec((bt, ho, wo, c_out), lambda b: (b, 0, 0, 0)),
                   pl.BlockSpec((1, 2, c_out), lambda b: (b, 0, 0))),
        scratch_shapes=[pltpu.VMEM((bt, ho + 2, wo + 2, c_out), jnp.float32)],
        compiler_params=cparams,
        cost_estimate=pl.CostEstimate(
            flops=2 * m * (9 * c_out) * c_out + 6 * m * c_out, transcendentals=0,
            bytes_accessed=int(m * c_out * 8 + w2m.size * 2)),
    )(acc1, scale1, shift1, w2m)

    scale2, shift2 = _fold_bn(stats2, m, g2, be2)

    # ---------------- phase 3: BN2 affine + residual + ReLU --------------------------
    out = pl.pallas_call(
        _make_phase3_kernel(c_out=c_out),
        grid=(nb,),
        out_shape=jax.ShapeDtypeStruct((n, ho, wo, c_out), jnp.float32),
        in_specs=[pl.BlockSpec((bt, ho, wo, c_out), lambda b: (b, 0, 0, 0)),
                  pl.BlockSpec((bt, ho, wo, c_out), lambda b: (b, 0, 0, 0)),
                  pl.BlockSpec((1, c_out), lambda b: (0, 0)),
                  pl.BlockSpec((1, c_out), lambda b: (0, 0))],
        out_specs=pl.BlockSpec((bt, ho, wo, c_out), lambda b: (b, 0, 0, 0)),
        compiler_params=cparams,
        cost_estimate=pl.CostEstimate(flops=4 * m * c_out, transcendentals=0,
                                      bytes_accessed=int(m * c_out * 12)),
    )(acc2, sc, scale2, shift2)

    return jnp.transpose(out, (0, 3, 1, 2))                      # back to NCHW


def basic_block_ref(x, params, *, use_1x1conv, strides):
    """Pure-JAX reference (NCHW, training-mode BN), mirrors the PyTorch forward."""
    w1, b1, g1, be1, w2, b2, g2, be2, w3, b3 = params

    def conv(x, w, b, stride, pad):
        y = jax.lax.conv_general_dilated(
            x, w, (stride, stride), [(pad, pad), (pad, pad)],
            dimension_numbers=('NCHW', 'OIHW', 'NCHW'))
        return y + b.reshape(1, -1, 1, 1)

    def bn(y, g, be):
        mean = jnp.mean(y, axis=(0, 2, 3), keepdims=True)
        var = jnp.mean((y - mean) ** 2, axis=(0, 2, 3), keepdims=True)
        return ((y - mean) * jax.lax.rsqrt(var + BN_EPS)
                * g.reshape(1, -1, 1, 1) + be.reshape(1, -1, 1, 1))

    y = jax.nn.relu(bn(conv(x, w1, b1, strides, 1), g1, be1))
    y = bn(conv(y, w2, b2, 1, 1), g2, be2)
    if use_1x1conv:
        x = conv(x, w3, b3, strides, 0)
    return jax.nn.relu(y + x)


def make_params(key, c_in, c_out, use_1x1conv):
    ks = jax.random.split(key, 10)
    w1 = 0.1 * jax.random.normal(ks[0], (c_out, c_in, 3, 3), jnp.float32)
    b1 = 0.1 * jax.random.normal(ks[1], (c_out,), jnp.float32)
    w2 = 0.1 * jax.random.normal(ks[2], (c_out, c_out, 3, 3), jnp.float32)
    b2 = 0.1 * jax.random.normal(ks[3], (c_out,), jnp.float32)
    g1 = 1.0 + 0.1 * jax.random.normal(ks[4], (c_out,), jnp.float32)
    be1 = 0.1 * jax.random.normal(ks[5], (c_out,), jnp.float32)
    g2 = 1.0 + 0.1 * jax.random.normal(ks[6], (c_out,), jnp.float32)
    be2 = 0.1 * jax.random.normal(ks[7], (c_out,), jnp.float32)
    if use_1x1conv:
        w3 = 0.1 * jax.random.normal(ks[8], (c_out, c_in, 1, 1), jnp.float32)
        b3 = 0.1 * jax.random.normal(ks[9], (c_out,), jnp.float32)
    else:
        w3 = jnp.zeros((c_out, c_in, 1, 1), jnp.float32)
        b3 = jnp.zeros((c_out,), jnp.float32)
    return (w1, b1, g1, be1, w2, b2, g2, be2, w3, b3)


if __name__ == "__main__":
    x = jax.random.normal(jax.random.PRNGKey(0), (2, 4, 16, 16), jnp.float32)

    # Config A: identity shortcut (use_1x1conv=False, strides=1)
    pA = make_params(jax.random.PRNGKey(1), 4, 4, False)
    outA = basic_block_forward(x, pA, use_1x1conv=False, strides=1)
    jax.block_until_ready(outA)
    refA = basic_block_ref(x, pA, use_1x1conv=False, strides=1)
    assert outA.shape == refA.shape == (2, 4, 16, 16)
    assert float(jnp.max(jnp.abs(outA - refA))) < 3e-2

    # Config B: projection shortcut (use_1x1conv=True, strides=2, Cout != Cin)
    pB = make_params(jax.random.PRNGKey(2), 4, 8, True)
    outB = basic_block_forward(x, pB, use_1x1conv=True, strides=2)
    jax.block_until_ready(outB)
    refB = basic_block_ref(x, pB, use_1x1conv=True, strides=2)
    assert outB.shape == refB.shape == (2, 8, 8, 8)
    assert float(jnp.max(jnp.abs(outB - refB))) < 3e-2

    print("KERNEL_OK")
</pallas_src>

<mosaic_0001>
module attributes {stable_mosaic.version = 11 : i64} {
  func.func @kernel(%arg0: i32, %arg1: memref<1x16x16x4xf32, #tpu.memory_space<vmem>>, %arg2: memref<36x4xbf16, #tpu.memory_space<vmem>>, %arg3: memref<1x16x16x4xf32, #tpu.memory_space<vmem>>, %arg4: memref<1x2x4xf32, #tpu.memory_space<vmem>>, %arg5: memref<1x18x18x4xf32, #tpu.memory_space<vmem>>) attributes {dimension_semantics = [#tpu.dimension_semantics<parallel>], iteration_bounds = array<i64: 2>, scalar_prefetch = 0 : i64, scratch_operands = 1 : i64, tpu.core_type = #tpu.core_type<tc>, window_params = [{transform_indices = @transform_0, window_bounds = array<i64: 1, 16, 16, 4>}, {pipeline_mode = #tpu.pipeline_mode<synchronous>, transform_indices = @transform_1, window_bounds = array<i64: 36, 4>}, {transform_indices = @transform_2, window_bounds = array<i64: 1, 16, 16, 4>}, {transform_indices = @transform_3, window_bounds = array<i64: 1, 2, 4>}]} {
    %cst = arith.constant 0.000000e+00 : f32
    %0 = vector.broadcast %cst : f32 to vector<1x1x18x4xf32>
    %c0 = arith.constant 0 : index
    %c0_0 = arith.constant 0 : index
    %c0_1 = arith.constant 0 : index
    %c0_2 = arith.constant 0 : index
    %1 = vector.load %arg5[%c0, %c0_0, %c0_1, %c0_2] : memref<1x18x18x4xf32, #tpu.memory_space<vmem>>, vector<1x1x18x4xf32>
    tpu.vector_store %arg5[%c0, %c0_0, %c0_1, %c0_2], %0 {strides = array<i32>} : memref<1x18x18x4xf32, #tpu.memory_space<vmem>>, vector<1x1x18x4xf32>,
    %cst_3 = arith.constant 0.000000e+00 : f32
    %2 = vector.broadcast %cst_3 : f32 to vector<1x1x18x4xf32>
    %c0_4 = arith.constant 0 : index
    %c17 = arith.constant 17 : index
    %c0_5 = arith.constant 0 : index
    %c0_6 = arith.constant 0 : index
    %3 = vector.load %arg5[%c0_4, %c17, %c0_5, %c0_6] : memref<1x18x18x4xf32, #tpu.memory_space<vmem>>, vector<1x1x18x4xf32>
    tpu.vector_store %arg5[%c0_4, %c17, %c0_5, %c0_6], %2 {strides = array<i32>} : memref<1x18x18x4xf32, #tpu.memory_space<vmem>>, vector<1x1x18x4xf32>,
    %cst_7 = arith.constant 0.000000e+00 : f32
    %4 = vector.broadcast %cst_7 : f32 to vector<1x16x1x4xf32>
    %c0_8 = arith.constant 0 : index
    %c1 = arith.constant 1 : index
    %c0_9 = arith.constant 0 : index
    %c0_10 = arith.constant 0 : index
    %5 = vector.load %arg5[%c0_8, %c1, %c0_9, %c0_10] : memref<1x18x18x4xf32, #tpu.memory_space<vmem>>, vector<1x16x1x4xf32>
    tpu.vector_store %arg5[%c0_8, %c1, %c0_9, %c0_10], %4 {strides = array<i32>} : memref<1x18x18x4xf32, #tpu.memory_space<vmem>>, vector<1x16x1x4xf32>,
    %cst_11 = arith.constant 0.000000e+00 : f32
    %6 = vector.broadcast %cst_11 : f32 to vector<1x16x1x4xf32>
    %c0_12 = arith.constant 0 : index
    %c1_13 = arith.constant 1 : index
    %c17_14 = arith.constant 17 : index
    %c0_15 = arith.constant 0 : index
    %7 = vector.load %arg5[%c0_12, %c1_13, %c17_14, %c0_15] : memref<1x18x18x4xf32, #tpu.memory_space<vmem>>, vector<1x16x1x4xf32>
    tpu.vector_store %arg5[%c0_12, %c1_13, %c17_14, %c0_15], %6 {strides = array<i32>} : memref<1x18x18x4xf32, #tpu.memory_space<vmem>>, vector<1x16x1x4xf32>,
    %c0_16 = arith.constant 0 : index
    %c0_17 = arith.constant 0 : index
    %c0_18 = arith.constant 0 : index
    %c0_19 = arith.constant 0 : index
    %8 = vector.load %arg1[%c0_16, %c0_17, %c0_18, %c0_19] : memref<1x16x16x4xf32, #tpu.memory_space<vmem>>, vector<1x16x16x4xf32>
    %c0_20 = arith.constant 0 : index
    %c1_21 = arith.constant 1 : index
    %c1_22 = arith.constant 1 : index
    %c0_23 = arith.constant 0 : index
    %9 = vector.load %arg5[%c0_20, %c1_21, %c1_22, %c0_23] : memref<1x18x18x4xf32, #tpu.memory_space<vmem>>, vector<1x16x16x4xf32>
    tpu.vector_store %arg5[%c0_20, %c1_21, %c1_22, %c0_23], %8 {strides = array<i32>} : memref<1x18x18x4xf32, #tpu.memory_space<vmem>>, vector<1x16x16x4xf32>,
    %c0_24 = arith.constant 0 : index
    %c0_25 = arith.constant 0 : index
    %c0_26 = arith.constant 0 : index
    %c0_27 = arith.constant 0 : index
    %10 = vector.load %arg5[%c0_24, %c0_25, %c0_26, %c0_27] : memref<1x18x18x4xf32, #tpu.memory_space<vmem>>, vector<1x16x16x4xf32>
    %11 = arith.truncf %10 : vector<1x16x16x4xf32> to vector<1x16x16x4xbf16>
    %12 = vector.shape_cast %11 : vector<1x16x16x4xbf16> to vector<256x4xbf16>
    %c0_28 = arith.constant 0 : index
    %c0_29 = arith.constant 0 : index
    %c1_30 = arith.constant 1 : index
    %c0_31 = arith.constant 0 : index
    %13 = vector.load %arg5[%c0_28, %c0_29, %c1_30, %c0_31] : memref<1x18x18x4xf32, #tpu.memory_space<vmem>>, vector<1x16x16x4xf32>
    %14 = arith.truncf %13 : vector<1x16x16x4xf32> to vector<1x16x16x4xbf16>
    %15 = vector.shape_cast %14 : vector<1x16x16x4xbf16> to vector<256x4xbf16>
    %c0_32 = arith.constant 0 : index
    %c0_33 = arith.constant 0 : index
    %c2 = arith.constant 2 : index
    %c0_34 = arith.constant 0 : index
    %16 = vector.load %arg5[%c0_32, %c0_33, %c2, %c0_34] : memref<1x18x18x4xf32, #tpu.memory_space<vmem>>, vector<1x16x16x4xf32>
    %17 = arith.truncf %16 : vector<1x16x16x4xf32> to vector<1x16x16x4xbf16>
    %18 = vector.shape_cast %17 : vector<1x16x16x4xbf16> to vector<256x4xbf16>
    %c0_35 = arith.constant 0 : index
    %c1_36 = arith.constant 1 : index
    %c0_37 = arith.constant 0 : index
    %c0_38 = arith.constant 0 : index
    %19 = vector.load %arg5[%c0_35, %c1_36, %c0_37, %c0_38] : memref<1x18x18x4xf32, #tpu.memory_space<vmem>>, vector<1x16x16x4xf32>
    %20 = arith.truncf %19 : vector<1x16x16x4xf32> to vector<1x16x16x4xbf16>
    %21 = vector.shape_cast %20 : vector<1x16x16x4xbf16> to vector<256x4xbf16>
    %c0_39 = arith.constant 0 : index
    %c1_40 = arith.constant 1 : index
    %c1_41 = arith.constant 1 : index
    %c0_42 = arith.constant 0 : index
    %22 = vector.load %arg5[%c0_39, %c1_40, %c1_41, %c0_42] : memref<1x18x18x4xf32, #tpu.memory_space<vmem>>, vector<1x16x16x4xf32>
    %23 = arith.truncf %22 : vector<1x16x16x4xf32> to vector<1x16x16x4xbf16>
    %24 = vector.shape_cast %23 : vector<1x16x16x4xbf16> to vector<256x4xbf16>
    %c0_43 = arith.constant 0 : index
    %c1_44 = arith.constant 1 : index
    %c2_45 = arith.constant 2 : index
    %c0_46 = arith.constant 0 : index
    %25 = vector.load %arg5[%c0_43, %c1_44, %c2_45, %c0_46] : memref<1x18x18x4xf32, #tpu.memory_space<vmem>>, vector<1x16x16x4xf32>
    %26 = arith.truncf %25 : vector<1x16x16x4xf32> to vector<1x16x16x4xbf16>
    %27 = vector.shape_cast %26 : vector<1x16x16x4xbf16> to vector<256x4xbf16>
    %c0_47 = arith.constant 0 : index
    %c2_48 = arith.constant 2 : index
    %c0_49 = arith.constant 0 : index
    %c0_50 = arith.constant 0 : index
    %28 = vector.load %arg5[%c0_47, %c2_48, %c0_49, %c0_50] : memref<1x18x18x4xf32, #tpu.memory_space<vmem>>, vector<1x16x16x4xf32>
    %29 = arith.truncf %28 : vector<1x16x16x4xf32> to vector<1x16x16x4xbf16>
    %30 = vector.shape_cast %29 : vector<1x16x16x4xbf16> to vector<256x4xbf16>
    %c0_51 = arith.constant 0 : index
    %c2_52 = arith.constant 2 : index
    %c1_53 = arith.constant 1 : index
    %c0_54 = arith.constant 0 : index
    %31 = vector.load %arg5[%c0_51, %c2_52, %c1_53, %c0_54] : memref<1x18x18x4xf32, #tpu.memory_space<vmem>>, vector<1x16x16x4xf32>
    %32 = arith.truncf %31 : vector<1x16x16x4xf32> to vector<1x16x16x4xbf16>
    %33 = vector.shape_cast %32 : vector<1x16x16x4xbf16> to vector<256x4xbf16>
    %c0_55 = arith.constant 0 : index
    %c2_56 = arith.constant 2 : index
    %c2_57 = arith.constant 2 : index
    %c0_58 = arith.constant 0 : index
    %34 = vector.load %arg5[%c0_55, %c2_56, %c2_57, %c0_58] : memref<1x18x18x4xf32, #tpu.memory_space<vmem>>, vector<1x16x16x4xf32>
    %35 = arith.truncf %34 : vector<1x16x16x4xf32> to vector<1x16x16x4xbf16>
    %36 = vector.shape_cast %35 : vector<1x16x16x4xbf16> to vector<256x4xbf16>
    %37 = tpu.concatenate %12, %15, %18, %21, %24, %27, %30, %33, %36 in 1 : vector<256x4xbf16>, vector<256x4xbf16>, vector<256x4xbf16>, vector<256x4xbf16>, vector<256x4xbf16>, vector<256x4xbf16>, vector<256x4xbf16>, vector<256x4xbf16>, vector<256x4xbf16> -> vector<256x36xbf16>
    %c0_59 = arith.constant 0 : index
    %c0_60 = arith.constant 0 : index
    %38 = vector.load %arg2[%c0_59, %c0_60] : memref<36x4xbf16, #tpu.memory_space<vmem>>, vector<36x4xbf16>
    %cst_61 = arith.constant dense<0.000000e+00> : vector<256x4xf32>
    %39 = tpu.matmul %37, %38, %cst_61 {dimension_numbers = #tpu.dot_dimension_numbers<[1], [0], [0], [1], [0, 0, 1, 1], [], []>} : vector<256x36xbf16>, vector<36x4xbf16>, vector<256x4xf32> -> vector<256x4xf32>
    %40 = vector.shape_cast %39 : vector<256x4xf32> to vector<1x16x16x4xf32>
    %c0_62 = arith.constant 0 : index
    %c0_63 = arith.constant 0 : index
    %c0_64 = arith.constant 0 : index
    %c0_65 = arith.constant 0 : index
    %41 = vector.load %arg3[%c0_62, %c0_63, %c0_64, %c0_65] : memref<1x16x16x4xf32, #tpu.memory_space<vmem>>, vector<1x16x16x4xf32>
    tpu.vector_store %arg3[%c0_62, %c0_63, %c0_64, %c0_65], %40 {strides = array<i32>} : memref<1x16x16x4xf32, #tpu.memory_space<vmem>>, vector<1x16x16x4xf32>,
    %cst_66 = arith.constant dense<0.000000e+00> : vector<4xf32>
    %42 = vector.multi_reduction <add>, %39, %cst_66 [0] : vector<256x4xf32> to vector<4xf32>
    %43 = vector.shape_cast %42 : vector<4xf32> to vector<1x4xf32>
    %44 = arith.mulf %39, %39 : vector<256x4xf32>
    %cst_67 = arith.constant dense<0.000000e+00> : vector<4xf32>
    %45 = vector.multi_reduction <add>, %44, %cst_67 [0] : vector<256x4xf32> to vector<4xf32>
    %46 = vector.shape_cast %45 : vector<4xf32> to vector<1x4xf32>
    %47 = tpu.concatenate %43, %46 in 0 : vector<1x4xf32>, vector<1x4xf32> -> vector<2x4xf32>
    %48 = vector.shape_cast %47 : vector<2x4xf32> to vector<1x2x4xf32>
    %c0_68 = arith.constant 0 : index
    %c0_69 = arith.constant 0 : index
    %c0_70 = arith.constant 0 : index
    %49 = vector.load %arg4[%c0_68, %c0_69, %c0_70] : memref<1x2x4xf32, #tpu.memory_space<vmem>>, vector<1x2x4xf32>
    tpu.vector_store %arg4[%c0_68, %c0_69, %c0_70], %48 {strides = array<i32>} : memref<1x2x4xf32, #tpu.memory_space<vmem>>, vector<1x2x4xf32>,
    return
  }
  func.func @transform_0(%arg0: i32) -> (i32, i32, i32, i32) {
    %c0_i32 = arith.constant 0 : i32
    %c0_i32_0 = arith.constant 0 : i32
    %c0_i32_1 = arith.constant 0 : i32
    %c0_i32_2 = arith.constant 0 : i32
    return %arg0, %c0_i32, %c0_i32_0, %c0_i32_1 : i32, i32, i32, i32
  }
  func.func @transform_1(%arg0: i32) -> (i32, i32) {
    %c0_i32 = arith.constant 0 : i32
    %c0_i32_0 = arith.constant 0 : i32
    %c0_i32_1 = arith.constant 0 : i32
    return %c0_i32, %c0_i32_0 : i32, i32
  }
  func.func @transform_2(%arg0: i32) -> (i32, i32, i32, i32) {
    %c0_i32 = arith.constant 0 : i32
    %c0_i32_0 = arith.constant 0 : i32
    %c0_i32_1 = arith.constant 0 : i32
    %c0_i32_2 = arith.constant 0 : i32
    return %arg0, %c0_i32, %c0_i32_0, %c0_i32_1 : i32, i32, i32, i32
  }
  func.func @transform_3(%arg0: i32) -> (i32, i32, i32) {
    %c0_i32 = arith.constant 0 : i32
    %c0_i32_0 = arith.constant 0 : i32
    %c0_i32_1 = arith.constant 0 : i32
    return %arg0, %c0_i32, %c0_i32_0 : i32, i32, i32
  }
}

</mosaic_0001>

<llo_original>
// kernel: tpu_custom_call.1
$region0: #{tpu_custom_call.1}
  #allocation0 [shape = 'u32[]', space=smem, size = 0x4, offset = 0x4, fixed_abs, tag = 'smem constant byte address 0x4 - core index']
  #allocation1 [shape = 'u32[144,128]{1,0:T(1,128)}', space=vmem, size = 0x12000, scoped, tag = 'internal scratch']
  #allocation2 [shape = 'f32[1,18,18,4]{3,2,1,0:T(8,128)}', space=vmem, size = 0x36000, scoped, tag = 'scratch operand']
  %s0 = inlined_call_operand.vmem [shape: f32[2,16,16,4], index: 0, kind: input, shape index: {}]
  %s1 = inlined_call_operand.vmem [shape: bf16[36,4], index: 1, kind: input, shape index: {}]
  %s2 = inlined_call_operand.vmem [shape: f32[2,16,16,4], index: 2, kind: output, shape index: {0}]
  %s3 = inlined_call_operand.hbm [shape: f32[2,2,4], index: 3, kind: output, shape index: {1}]
  %4 = xla_tuple %s2, %s3
  %s5 = sld [smem:[#allocation0]]
  $region49: #{tpu_custom_call.1} parent=0
    _
  %s7 = ssub.s32 1, %s5
  %s8 = scalar_select 0, %s7, %s5
  $region1: #{tpu_custom_call.1} parent=0
    #allocation3 [shape = 'u8[2048]{0}', space=vmem, size = 0x800, scoped, tag = 'output window, operand 1']
    #allocation4 [shape = 's32[2]{0}', space=sflag, size = 0x8, scoped, tag = 'scoped memory for tpu_custom_call.1']
    %9 = vsyncpa [#allocation4], 0
    %s10 = scalar_lea.sflag [#allocation4], 1
    %11 = vsyncpa %s10, 0
    loop: start=0, step=1, limit=4
    $region2: #{tpu_custom_call.1} parent=1 // loop_pre_header
      _
    $region3: #{tpu_custom_call.1} parent=1 // loop_header
      %s13 = sphi 0, %s17
      %p14 = scmp.ge.s32.totalorder %s13, 4
      %s23 = sphi 0, %s25
      %s26 = sphi 0, %s23
      %s27 = sphi 0, %s26
      %s43 = sphi 0, %s27
      %s47 = sphi 0, %s47
      %s49 = sphi 0, %s47
      %s50 = sphi 0, %s49
      %s64 = sphi 0, %s50
      %s70 = sphi 0, %s72
      %s73 = sphi 0, %s70
      %s74 = sphi 0, %s73
      %s90 = sphi 0, %s74
      %s96 = sphi 0, %s98
      %s99 = sphi 0, %s96
      %s100 = sphi 0, %s99
      %s116 = sphi 0, %s100
    $region4: #{tpu_custom_call.1} parent=1 // loop_header_branch
      %16 = sbr.rel (%p14) target = $region8
    $region5: #{tpu_custom_call.1} parent=1 // loop_body
      %s18 = ssub.s32 %s13, 1
      %s19 = ssub.s32 %s13, 2
      %s20 = sadd.s32 %s13, 1
      %s21 = ssub.s32 %s13, %s20
      %p22 = scmp.eq.s32.totalorder %s21, 0
      %s24 = sadd.s32 %s23, 1
      %s25 = scalar_select %p22, %s23, %s24
      %p28 = pneg %p22
      %p29 = scmp.eq.s32.totalorder %s13, 1
      %p30 = por %p28, %p29
      %p31 = scmp.ne.s32.totalorder %s23, %s26
      %p32 = scmp.eq.s32.totalorder %s13, 0
      %p33 = por %p31, %p32
      %p34 = scmp.ne.s32.totalorder %s23, %s26
      %p35 = scmp.eq.s32.totalorder %s18, 1
      %p36 = por %p34, %p35
      %p37 = scmp.ne.s32.totalorder %s26, %s27
      %p38 = scmp.eq.s32.totalorder %s18, 0
      %p39 = por %p37, %p38
      %p40 = scmp.ne.s32.totalorder %s26, %s27
      %p41 = scmp.eq.s32.totalorder %s19, 1
      %p42 = por %p40, %p41
      %p44 = scmp.ne.s32.totalorder %s27, %s43
      %p45 = scmp.eq.s32.totalorder %s19, 0
      %p46 = por %p44, %p45
      %s48 = sadd.s32 %s47, 1
      %p51 = scmp.eq.s32.totalorder %s13, 1
      %p52 = scmp.ne.s32.totalorder %s47, %s49
      %p53 = scmp.eq.s32.totalorder %s13, 0
      %p54 = por %p52, %p53
      %p55 = scmp.ne.s32.totalorder %s47, %s49
      %p56 = scmp.eq.s32.totalorder %s18, 1
      %p57 = por %p55, %p56
      %p58 = scmp.ne.s32.totalorder %s49, %s50
      %p59 = scmp.eq.s32.totalorder %s18, 0
      %p60 = por %p58, %p59
      %p61 = scmp.ne.s32.totalorder %s49, %s50
      %p62 = scmp.eq.s32.totalorder %s19, 1
      %p63 = por %p61, %p62
      %p65 = scmp.ne.s32.totalorder %s50, %s64
      %p66 = scmp.eq.s32.totalorder %s19, 0
      %p67 = por %p65, %p66
      %s68 = ssub.s32 %s13, %s20
      %p69 = scmp.eq.s32.totalorder %s68, 0
      %s71 = sadd.s32 %s70, 1
      %s72 = scalar_select %p69, %s70, %s71
      %p75 = pneg %p69
      %p76 = scmp.eq.s32.totalorder %s13, 1
      %p77 = por %p75, %p76
      %p78 = scmp.ne.s32.totalorder %s70, %s73
      %p79 = scmp.eq.s32.totalorder %s13, 0
      %p80 = por %p78, %p79
      %p81 = scmp.ne.s32.totalorder %s70, %s73
      %p82 = scmp.eq.s32.totalorder %s18, 1
      %p83 = por %p81, %p82
      %p84 = scmp.ne.s32.totalorder %s73, %s74
      %p85 = scmp.eq.s32.totalorder %s18, 0
      %p86 = por %p84, %p85
      %p87 = scmp.ne.s32.totalorder %s73, %s74
      %p88 = scmp.eq.s32.totalorder %s19, 1
      %p89 = por %p87, %p88
      %p91 = scmp.ne.s32.totalorder %s74, %s90
      %p92 = scmp.eq.s32.totalorder %s19, 0
      %p93 = por %p91, %p92
      %s94 = ssub.s32 %s13, %s20
      %p95 = scmp.eq.s32.totalorder %s94, 0
      %s97 = sadd.s32 %s96, 1
      %s98 = scalar_select %p95, %s96, %s97
      %p101 = pneg %p95
      %p102 = scmp.eq.s32.totalorder %s13, 1
      %p103 = por %p101, %p102
      %p104 = scmp.ne.s32.totalorder %s96, %s99
      %p105 = scmp.eq.s32.totalorder %s13, 0
      %p106 = por %p104, %p105
      %p107 = scmp.ne.s32.totalorder %s96, %s99
      %p108 = scmp.eq.s32.totalorder %s18, 1
      %p109 = por %p107, %p108
      %p110 = scmp.ne.s32.totalorder %s99, %s100
      %p111 = scmp.eq.s32.totalorder %s18, 0
      %p112 = por %p110, %p111
      %p113 = scmp.ne.s32.totalorder %s99, %s100
      %p114 = scmp.eq.s32.totalorder %s19, 1
      %p115 = por %p113, %p114
      %p117 = scmp.ne.s32.totalorder %s100, %s116
      %p118 = scmp.eq.s32.totalorder %s19, 0
      %p119 = por %p117, %p118
      %p120 = scmp.le.s32.totalorder 1, %s13
      %p121 = scmp.lt.s32.totalorder %s13, 3
      %p122 = pnand %p120, %p121
      %p123 = pneg %p122
      // Predicated region
      $region9: #{tpu_custom_call.1} parent=5 // pred_check
        _
      $region10: #{tpu_custom_call.1} parent=5 // pred_check_branch
        %125 = sbr.rel (%p122) target = $region12
      $region11: #{tpu_custom_call.1} parent=5 // pred_region
        %s126 = ssub.s32 %s13, 1
        // Predicated region
        $region13: #{tpu_custom_call.1} parent=11 // pred_check
          %p127 = pneg %p60
        $region14: #{tpu_custom_call.1} parent=11 // pred_check_branch
          %129 = sbr.rel (%p127) target = $region16
        $region15: #{tpu_custom_call.1} parent=11 // pred_region
          _
        $region16: #{tpu_custom_call.1} parent=11 // pred_fallthru
          _
      $region12: #{tpu_custom_call.1} parent=5 // pred_fallthru
        _
      %p130 = scmp.lt.s32.totalorder %s13, 2
      // Predicated region
      $region17: #{tpu_custom_call.1} parent=5 // pred_check
        %p131 = pneg %p130
      $region18: #{tpu_custom_call.1} parent=5 // pred_check_branch
        %133 = sbr.rel (%p131) target = $region20
      $region19: #{tpu_custom_call.1} parent=5 // pred_region
        // Predicated region
        $region21: #{tpu_custom_call.1} parent=19 // pred_check
          %p134 = pneg %p33
        $region22: #{tpu_custom_call.1} parent=19 // pred_check_branch
          %136 = sbr.rel (%p134) target = $region24
        $region23: #{tpu_custom_call.1} parent=19 // pred_region
          %p137 = scmp.lt.s32.totalorder %s13, 1
          %s138 = scalar_select %p137, %s13, 1
          %s139 = smul.addr %s138, 32
          %s140 = smul.addr %s139, 8
          %s141 = scalar_lea.vmem %s0, %s140
        $region24: #{tpu_custom_call.1} parent=19 // pred_fallthru
          _
      $region20: #{tpu_custom_call.1} parent=5 // pred_fallthru
        _
      %p142 = scmp.le.s32.totalorder 1, %s13
      %p143 = scmp.lt.s32.totalorder %s13, 3
      %p144 = pnand %p142, %p143
      %p145 = pneg %p144
      // Predicated region
      $region25: #{tpu_custom_call.1} parent=5 // pred_check
        _
      $region26: #{tpu_custom_call.1} parent=5 // pred_check_branch
        %147 = sbr.rel (%p144) target = $region28
      $region27: #{tpu_custom_call.1} parent=5 // pred_region
        %s148 = ssub.s32 %s13, 1
        %p149 = scmp.lt.s32.totalorder %s18, 1
        %s150 = scalar_select %p149, %s18, 1
        %s151 = smul.addr %s150, 32
        %s152 = smul.addr %s151, 8
        %s153 = scalar_lea.vmem %s0, %s152
        %p154 = pneg %p39
        %p155 = pneg %p36
        %p156 = pneg %p60
        %p157 = pneg %p57
        %p158 = pneg %p86
        %p159 = pneg %p83
        %p160 = scmp.lt.s32.totalorder %s18, 1
        %s161 = scalar_select %p160, %s18, 1
        %s162 = smul.addr %s161, 32
        %s163 = smul.addr %s162, 8
        %s164 = scalar_lea.vmem %s2, %s163
        %p165 = pneg %p112
        %p166 = pneg %p109
        %s167 = sand.u32 %s99, 1
        %s168 = scalar_lea.sflag [#allocation4], %s167
        %s169 = sand.u32 %s99, 1
        %s170 = smul.addr %s169, 2
        %s171 = scalar_lea.vmem [#allocation3], %s170
        %p172 = scmp.lt.s32.totalorder %s18, 1
        %s173 = scalar_select %p172, %s18, 1
        %s174 = smul.addr %s173, 32
        %s175 = smul.addr %s174, 8
        %s176 = scalar_lea.vmem %s0, %s175
        %p177 = scmp.lt.s32.totalorder %s18, 1
        %s178 = scalar_select %p177, %s18, 1
        %s179 = smul.addr %s178, 32
        %s180 = smul.addr %s179, 8
        %s181 = scalar_lea.vmem %s2, %s180
        %vm183 = vcmask 31744
        %184 = vst.msk [vmem:[#allocation2] sm:$0xff] %vm183, 0.0
        %185 = vst.msk [vmem:[#allocation2 + $0x8] sm:$0xff] %vm183, 0.0
        %vm186 = vcmask 25600
        %187 = vst.msk [vmem:[#allocation2 + $0x10] sm:$0x3] %vm186, 0.0
        %s188 = scalar_lea.vmem [#allocation2], 408
        %189 = vst.msk [vmem:[%s188] sm:$0xff] %vm183, 0.0
        %190 = vst.msk [vmem:[%s188 + $0x8] sm:$0xff] %vm183, 0.0
        %191 = vst.msk [vmem:[%s188 + $0x10] sm:$0x3] %vm186, 0.0
        %s192 = scalar_lea.vmem [#allocation2], 24
        %vm193 = vcmask 24576
        %194 = vst.msk [vmem:[%s192] sm:$0x1] %vm193, 0.0
        %195 = vst.msk [vmem:[%s192 + $0x18] sm:$0x1] %vm193, 0.0
        %196 = vst.msk [vmem:[%s192 + $0x30] sm:$0x1] %vm193, 0.0
        %197 = vst.msk [vmem:[%s192 + $0x48] sm:$0x1] %vm193, 0.0
        %198 = vst.msk [vmem:[%s192 + $0x60] sm:$0x1] %vm193, 0.0
        %199 = vst.msk [vmem:[%s192 + $0x78] sm:$0x1] %vm193, 0.0
        %200 = vst.msk [vmem:[%s192 + $0x90] sm:$0x1] %vm193, 0.0
        %201 = vst.msk [vmem:[%s192 + $0xa8] sm:$0x1] %vm193, 0.0
        %202 = vst.msk [vmem:[%s192 + $0xc0] sm:$0x1] %vm193, 0.0
        %203 = vst.msk [vmem:[%s192 + $0xd8] sm:$0x1] %vm193, 0.0
        %204 = vst.msk [vmem:[%s192 + $0xf0] sm:$0x1] %vm193, 0.0
        %205 = vst.msk [vmem:[%s192 + $0x108] sm:$0x1] %vm193, 0.0
        %206 = vst.msk [vmem:[%s192 + $0x120] sm:$0x1] %vm193, 0.0
        %207 = vst.msk [vmem:[%s192 + $0x138] sm:$0x1] %vm193, 0.0
        %208 = vst.msk [vmem:[%s192 + $0x150] sm:$0x1] %vm193, 0.0
        %209 = vst.msk [vmem:[%s192 + $0x168] sm:$0x1] %vm193, 0.0
        %210 = vst.msk [vmem:[%s192 + $0x11] sm:$0x1] %vm193, 0.0
        %211 = vst.msk [vmem:[%s192 + $0x29] sm:$0x1] %vm193, 0.0
        %212 = vst.msk [vmem:[%s192 + $0x41] sm:$0x1] %vm193, 0.0
        %213 = vst.msk [vmem:[%s192 + $0x59] sm:$0x1] %vm193, 0.0
        %214 = vst.msk [vmem:[%s192 + $0x71] sm:$0x1] %vm193, 0.0
        %215 = vst.msk [vmem:[%s192 + $0x89] sm:$0x1] %vm193, 0.0
        %216 = vst.msk [vmem:[%s192 + $0xa1] sm:$0x1] %vm193, 0.0
        %217 = vst.msk [vmem:[%s192 + $0xb9] sm:$0x1] %vm193, 0.0
        %218 = vst.msk [vmem:[%s192 + $0xd1] sm:$0x1] %vm193, 0.0
        %219 = vst.msk [vmem:[%s192 + $0xe9] sm:$0x1] %vm193, 0.0
        %220 = vst.msk [vmem:[%s192 + $0x101] sm:$0x1] %vm193, 0.0
        %221 = vst.msk [vmem:[%s192 + $0x119] sm:$0x1] %vm193, 0.0
        %222 = vst.msk [vmem:[%s192 + $0x131] sm:$0x1] %vm193, 0.0
        %223 = vst.msk [vmem:[%s192 + $0x149] sm:$0x1] %vm193, 0.0
        %224 = vst.msk [vmem:[%s192 + $0x161] sm:$0x1] %vm193, 0.0
        %225 = vst.msk [vmem:[%s192 + $0x179] sm:$0x1] %vm193, 0.0
        %v226 = vld [vmem:[%s176] sm:$0xff]
        %v227 = vld [vmem:[%s176 + $0x8] sm:$0xff]
        %v228 = vld [vmem:[%s176 + $0x10] sm:$0xff]
        %v229 = vld [vmem:[%s176 + $0x18] sm:$0xff]
        %v230 = vld [vmem:[%s176 + $0x20] sm:$0xff]
        %v231 = vld [vmem:[%s176 + $0x28] sm:$0xff]
        %v232 = vld [vmem:[%s176 + $0x30] sm:$0xff]
        %v233 = vld [vmem:[%s176 + $0x38] sm:$0xff]
        %v234 = vld [vmem:[%s176 + $0x40] sm:$0xff]
        %v235 = vld [vmem:[%s176 + $0x48] sm:$0xff]
        %v236 = vld [vmem:[%s176 + $0x50] sm:$0xff]
        %v237 = vld [vmem:[%s176 + $0x58] sm:$0xff]
        %v238 = vld [vmem:[%s176 + $0x60] sm:$0xff]
        %v239 = vld [vmem:[%s176 + $0x68] sm:$0xff]
        %v240 = vld [vmem:[%s176 + $0x70] sm:$0xff]
        %v241 = vld [vmem:[%s176 + $0x78] sm:$0xff]
        %v242 = vld [vmem:[%s176 + $0x80] sm:$0xff]
        %v243 = vld [vmem:[%s176 + $0x88] sm:$0xff]
        %v244 = vld [vmem:[%s176 + $0x90] sm:$0xff]
        %v245 = vld [vmem:[%s176 + $0x98] sm:$0xff]
        %v246 = vld [vmem:[%s176 + $0xa0] sm:$0xff]
        %v247 = vld [vmem:[%s176 + $0xa8] sm:$0xff]
        %v248 = vld [vmem:[%s176 + $0xb0] sm:$0xff]
        %v249 = vld [vmem:[%s176 + $0xb8] sm:$0xff]
        %v250 = vld [vmem:[%s176 + $0xc0] sm:$0xff]
        %v251 = vld [vmem:[%s176 + $0xc8] sm:$0xff]
        %v252 = vld [vmem:[%s176 + $0xd0] sm:$0xff]
        %v253 = vld [vmem:[%s176 + $0xd8] sm:$0xff]
        %v254 = vld [vmem:[%s176 + $0xe0] sm:$0xff]
        %v255 = vld [vmem:[%s176 + $0xe8] sm:$0xff]
        %v256 = vld [vmem:[%s176 + $0xf0] sm:$0xff]
        %v257 = vld [vmem:[%s176 + $0xf8] sm:$0xff]
        %258 = vst.msk [vmem:[%s192 + $0x1] sm:$0xff] %vm183, %v226
        %259 = vst.msk [vmem:[%s192 + $0x9] sm:$0xff] %vm183, %v227
        %260 = vst.msk [vmem:[%s192 + $0x19] sm:$0xff] %vm183, %v228
        %261 = vst.msk [vmem:[%s192 + $0x21] sm:$0xff] %vm183, %v229
        %262 = vst.msk [vmem:[%s192 + $0x31] sm:$0xff] %vm183, %v230
        %263 = vst.msk [vmem:[%s192 + $0x39] sm:$0xff] %vm183, %v231
        %264 = vst.msk [vmem:[%s192 + $0x49] sm:$0xff] %vm183, %v232
        %265 = vst.msk [vmem:[%s192 + $0x51] sm:$0xff] %vm183, %v233
        %266 = vst.msk [vmem:[%s192 + $0x61] sm:$0xff] %vm183, %v234
        %267 = vst.msk [vmem:[%s192 + $0x69] sm:$0xff] %vm183, %v235
        %268 = vst.msk [vmem:[%s192 + $0x79] sm:$0xff] %vm183, %v236
        %269 = vst.msk [vmem:[%s192 + $0x81] sm:$0xff] %vm183, %v237
        %270 = vst.msk [vmem:[%s192 + $0x91] sm:$0xff] %vm183, %v238
        %271 = vst.msk [vmem:[%s192 + $0x99] sm:$0xff] %vm183, %v239
        %272 = vst.msk [vmem:[%s192 + $0xa9] sm:$0xff] %vm183, %v240
        %273 = vst.msk [vmem:[%s192 + $0xb1] sm:$0xff] %vm183, %v241
        %274 = vst.msk [vmem:[%s192 + $0xc1] sm:$0xff] %vm183, %v242
        %275 = vst.msk [vmem:[%s192 + $0xc9] sm:$0xff] %vm183, %v243
        %276 = vst.msk [vmem:[%s192 + $0xd9] sm:$0xff] %vm183, %v244
        %277 = vst.msk [vmem:[%s192 + $0xe1] sm:$0xff] %vm183, %v245
        %278 = vst.msk [vmem:[%s192 + $0xf1] sm:$0xff] %vm183, %v246
        %279 = vst.msk [vmem:[%s192 + $0xf9] sm:$0xff] %vm183, %v247
        %280 = vst.msk [vmem:[%s192 + $0x109] sm:$0xff] %vm183, %v248
        %281 = vst.msk [vmem:[%s192 + $0x111] sm:$0xff] %vm183, %v249
        %282 = vst.msk [vmem:[%s192 + $0x121] sm:$0xff] %vm183, %v250
        %283 = vst.msk [vmem:[%s192 + $0x129] sm:$0xff] %vm183, %v251
        %284 = vst.msk [vmem:[%s192 + $0x139] sm:$0xff] %vm183, %v252
        %285 = vst.msk [vmem:[%s192 + $0x141] sm:$0xff] %vm183, %v253
        %286 = vst.msk [vmem:[%s192 + $0x151] sm:$0xff] %vm183, %v254
        %287 = vst.msk [vmem:[%s192 + $0x159] sm:$0xff] %vm183, %v255
        %288 = vst.msk [vmem:[%s192 + $0x169] sm:$0xff] %vm183, %v256
        %289 = vst.msk [vmem:[%s192 + $0x171] sm:$0xff] %vm183, %v257
        %v290 = vld [vmem:[#allocation2] sm:$0xff]
        %v291 = vld [vmem:[#allocation2 + $0x8] sm:$0xff]
        %v292 = vld [vmem:[#allocation2 + $0x18] sm:$0xff]
        %v293 = vld [vmem:[#allocation2 + $0x20] sm:$0xff]
        %v294 = vld [vmem:[#allocation2 + $0x30] sm:$0xff]
        %v295 = vld [vmem:[#allocation2 + $0x38] sm:$0xff]
        %v296 = vld [vmem:[#allocation2 + $0x48] sm:$0xff]
        %v297 = vld [vmem:[#allocation2 + $0x50] sm:$0xff]
        %v298 = vld [vmem:[#allocation2 + $0x60] sm:$0xff]
        %v299 = vld [vmem:[#allocation2 + $0x68] sm:$0xff]
        %v300 = vld [vmem:[#allocation2 + $0x78] sm:$0xff]
        %v301 = vld [vmem:[#allocation2 + $0x80] sm:$0xff]
        %v302 = vld [vmem:[#allocation2 + $0x90] sm:$0xff]
        %v303 = vld [vmem:[#allocation2 + $0x98] sm:$0xff]
        %v304 = vld [vmem:[#allocation2 + $0xa8] sm:$0xff]
        %v305 = vld [vmem:[#allocation2 + $0xb0] sm:$0xff]
        %v306 = vld [vmem:[#allocation2 + $0xc0] sm:$0xff]
        %v307 = vld [vmem:[#allocation2 + $0xc8] sm:$0xff]
        %v308 = vld [vmem:[#allocation2 + $0xd8] sm:$0xff]
        %v309 = vld [vmem:[#allocation2 + $0xe0] sm:$0xff]
        %v310 = vld [vmem:[#allocation2 + $0xf0] sm:$0xff]
        %v311 = vld [vmem:[#allocation2 + $0xf8] sm:$0xff]
        %v312 = vld [vmem:[#allocation2 + $0x108] sm:$0xff]
        %v313 = vld [vmem:[#allocation2 + $0x110] sm:$0xff]
        %v314 = vld [vmem:[#allocation2 + $0x120] sm:$0xff]
        %v315 = vld [vmem:[#allocation2 + $0x128] sm:$0xff]
        %v316 = vld [vmem:[#allocation2 + $0x138] sm:$0xff]
        %v317 = vld [vmem:[#allocation2 + $0x140] sm:$0xff]
        %v318 = vld [vmem:[#allocation2 + $0x150] sm:$0xff]
        %v319 = vld [vmem:[#allocation2 + $0x158] sm:$0xff]
        %v320 = vld [vmem:[#allocation2 + $0x168] sm:$0xff]
        %v321 = vld [vmem:[#allocation2 + $0x170] sm:$0xff]
        %v322 = vpack.c.bf16 %v291, %v290
        %v323 = vpack.c.bf16 %v293, %v292
        %v324 = vpack.c.bf16 %v295, %v294
        %v325 = vpack.c.bf16 %v297, %v296
        %v326 = vpack.c.bf16 %v299, %v298
        %v327 = vpack.c.bf16 %v301, %v300
        %v328 = vpack.c.bf16 %v303, %v302
        %v329 = vpack.c.bf16 %v305, %v304
        %v330 = vpack.c.bf16 %v307, %v306
        %v331 = vpack.c.bf16 %v309, %v308
        %v332 = vpack.c.bf16 %v311, %v310
        %v333 = vpack.c.bf16 %v313, %v312
        %v334 = vpack.c.bf16 %v315, %v314
        %v335 = vpack.c.bf16 %v317, %v316
        %v336 = vpack.c.bf16 %v319, %v318
        %v337 = vpack.c.bf16 %v321, %v320
        %v338 = vld [vmem:[#allocation2 + $0x1] sm:$0xff]
        %v339 = vld [vmem:[#allocation2 + $0x9] sm:$0xff]
        %v340 = vld [vmem:[#allocation2 + $0x19] sm:$0xff]
        %v341 = vld [vmem:[#allocation2 + $0x21] sm:$0xff]
        %v342 = vld [vmem:[#allocation2 + $0x31] sm:$0xff]
        %v343 = vld [vmem:[#allocation2 + $0x39] sm:$0xff]
        %v344 = vld [vmem:[#allocation2 + $0x49] sm:$0xff]
        %v345 = vld [vmem:[#allocation2 + $0x51] sm:$0xff]
        %v346 = vld [vmem:[#allocation2 + $0x61] sm:$0xff]
        %v347 = vld [vmem:[#allocation2 + $0x69] sm:$0xff]
        %v348 = vld [vmem:[#allocation2 + $0x79] sm:$0xff]
        %v349 = vld [vmem:[#allocation2 + $0x81] sm:$0xff]
        %v350 = vld [vmem:[#allocation2 + $0x91] sm:$0xff]
        %v351 = vld [vmem:[#allocation2 + $0x99] sm:$0xff]
        %v352 = vld [vmem:[#allocation2 + $0xa9] sm:$0xff]
        %v353 = vld [vmem:[#allocation2 + $0xb1] sm:$0xff]
        %v354 = vld [vmem:[#allocation2 + $0xc1] sm:$0xff]
        %v355 = vld [vmem:[#allocation2 + $0xc9] sm:$0xff]
        %v356 = vld [vmem:[#allocation2 + $0xd9] sm:$0xff]
        %v357 = vld [vmem:[#allocation2 + $0xe1] sm:$0xff]
        %v358 = vld [vmem:[#allocation2 + $0xf1] sm:$0xff]
        %v359 = vld [vmem:[#allocation2 + $0xf9] sm:$0xff]
        %v360 = vld [vmem:[#allocation2 + $0x109] sm:$0xff]
        %v361 = vld [vmem:[#allocation2 + $0x111] sm:$0xff]
        %v362 = vld [vmem:[#allocation2 + $0x121] sm:$0xff]
        %v363 = vld [vmem:[#allocation2 + $0x129] sm:$0xff]
        %v364 = vld [vmem:[#allocation2 + $0x139] sm:$0xff]
        %v365 = vld [vmem:[#allocation2 + $0x141] sm:$0xff]
        %v366 = vld [vmem:[#allocation2 + $0x151] sm:$0xff]
        %v367 = vld [vmem:[#allocation2 + $0x159] sm:$0xff]
        %v368 = vld [vmem:[#allocation2 + $0x169] sm:$0xff]
        %v369 = vld [vmem:[#allocation2 + $0x171] sm:$0xff]
        %v370 = vpack.c.bf16 %v339, %v338
        %v371 = vpack.c.bf16 %v341, %v340
        %v372 = vpack.c.bf16 %v343, %v342
        %v373 = vpack.c.bf16 %v345, %v344
        %v374 = vpack.c.bf16 %v347, %v346
        %v375 = vpack.c.bf16 %v349, %v348
        %v376 = vpack.c.bf16 %v351, %v350
        %v377 = vpack.c.bf16 %v353, %v352
        %v378 = vpack.c.bf16 %v355, %v354
        %v379 = vpack.c.bf16 %v357, %v356
        %v380 = vpack.c.bf16 %v359, %v358
        %v381 = vpack.c.bf16 %v361, %v360
        %v382 = vpack.c.bf16 %v363, %v362
        %v383 = vpack.c.bf16 %v365, %v364
        %v384 = vpack.c.bf16 %v367, %v366
        %v385 = vpack.c.bf16 %v369, %v368
        %v386 = vld [vmem:[#allocation2 + $0x2] sm:$0xff]
        %v387 = vld [vmem:[#allocation2 + $0xa] sm:$0xff]
        %v388 = vld [vmem:[#allocation2 + $0x1a] sm:$0xff]
        %v389 = vld [vmem:[#allocation2 + $0x22] sm:$0xff]
        %v390 = vld [vmem:[#allocation2 + $0x32] sm:$0xff]
        %v391 = vld [vmem:[#allocation2 + $0x3a] sm:$0xff]
        %v392 = vld [vmem:[#allocation2 + $0x4a] sm:$0xff]
        %v393 = vld [vmem:[#allocation2 + $0x52] sm:$0xff]
        %v394 = vld [vmem:[#allocation2 + $0x62] sm:$0xff]
        %v395 = vld [vmem:[#allocation2 + $0x6a] sm:$0xff]
        %v396 = vld [vmem:[#allocation2 + $0x7a] sm:$0xff]
        %v397 = vld [vmem:[#allocation2 + $0x82] sm:$0xff]
        %v398 = vld [vmem:[#allocation2 + $0x92] sm:$0xff]
        %v399 = vld [vmem:[#allocation2 + $0x9a] sm:$0xff]
        %v400 = vld [vmem:[#allocation2 + $0xaa] sm:$0xff]
        %v401 = vld [vmem:[#allocation2 + $0xb2] sm:$0xff]
        %v402 = vld [vmem:[#allocation2 + $0xc2] sm:$0xff]
        %v403 = vld [vmem:[#allocation2 + $0xca] sm:$0xff]
        %v404 = vld [vmem:[#allocation2 + $0xda] sm:$0xff]
        %v405 = vld [vmem:[#allocation2 + $0xe2] sm:$0xff]
        %v406 = vld [vmem:[#allocation2 + $0xf2] sm:$0xff]
        %v407 = vld [vmem:[#allocation2 + $0xfa] sm:$0xff]
        %v408 = vld [vmem:[#allocation2 + $0x10a] sm:$0xff]
        %v409 = vld [vmem:[#allocation2 + $0x112] sm:$0xff]
        %v410 = vld [vmem:[#allocation2 + $0x122] sm:$0xff]
        %v411 = vld [vmem:[#allocation2 + $0x12a] sm:$0xff]
        %v412 = vld [vmem:[#allocation2 + $0x13a] sm:$0xff]
        %v413 = vld [vmem:[#allocation2 + $0x142] sm:$0xff]
        %v414 = vld [vmem:[#allocation2 + $0x152] sm:$0xff]
        %v415 = vld [vmem:[#allocation2 + $0x15a] sm:$0xff]
        %v416 = vld [vmem:[#allocation2 + $0x16a] sm:$0xff]
        %v417 = vld [vmem:[#allocation2 + $0x172] sm:$0xff]
        %v418 = vpack.c.bf16 %v387, %v386
        %v419 = vpack.c.bf16 %v389, %v388
        %v420 = vpack.c.bf16 %v391, %v390
        %v421 = vpack.c.bf16 %v393, %v392
        %v422 = vpack.c.bf16 %v395, %v394
        %v423 = vpack.c.bf16 %v397, %v396
        %v424 = vpack.c.bf16 %v399, %v398
        %v425 = vpack.c.bf16 %v401, %v400
        %v426 = vpack.c.bf16 %v403, %v402
        %v427 = vpack.c.bf16 %v405, %v404
        %v428 = vpack.c.bf16 %v407, %v406
        %v429 = vpack.c.bf16 %v409, %v408
        %v430 = vpack.c.bf16 %v411, %v410
        %v431 = vpack.c.bf16 %v413, %v412
        %v432 = vpack.c.bf16 %v415, %v414
        %v433 = vpack.c.bf16 %v417, %v416
        %v434 = vld [vmem:[%s192] sm:$0xff]
        %v435 = vld [vmem:[%s192 + $0x8] sm:$0xff]
        %v436 = vld [vmem:[%s192 + $0x18] sm:$0xff]
        %v437 = vld [vmem:[%s192 + $0x20] sm:$0xff]
        %v438 = vld [vmem:[%s192 + $0x30] sm:$0xff]
        %v439 = vld [vmem:[%s192 + $0x38] sm:$0xff]
        %v440 = vld [vmem:[%s192 + $0x48] sm:$0xff]
        %v441 = vld [vmem:[%s192 + $0x50] sm:$0xff]
        %v442 = vld [vmem:[%s192 + $0x60] sm:$0xff]
        %v443 = vld [vmem:[%s192 + $0x68] sm:$0xff]
        %v444 = vld [vmem:[%s192 + $0x78] sm:$0xff]
        %v445 = vld [vmem:[%s192 + $0x80] sm:$0xff]
        %v446 = vld [vmem:[%s192 + $0x90] sm:$0xff]
        %v447 = vld [vmem:[%s192 + $0x98] sm:$0xff]
        %v448 = vld [vmem:[%s192 + $0xa8] sm:$0xff]
        %v449 = vld [vmem:[%s192 + $0xb0] sm:$0xff]
        %v450 = vld [vmem:[%s192 + $0xc0] sm:$0xff]
        %v451 = vld [vmem:[%s192 + $0xc8] sm:$0xff]
        %v452 = vld [vmem:[%s192 + $0xd8] sm:$0xff]
        %v453 = vld [vmem:[%s192 + $0xe0] sm:$0xff]
        %v454 = vld [vmem:[%s192 + $0xf0] sm:$0xff]
        %v455 = vld [vmem:[%s192 + $0xf8] sm:$0xff]
        %v456 = vld [vmem:[%s192 + $0x108] sm:$0xff]
        %v457 = vld [vmem:[%s192 + $0x110] sm:$0xff]
        %v458 = vld [vmem:[%s192 + $0x120] sm:$0xff]
        %v459 = vld [vmem:[%s192 + $0x128] sm:$0xff]
        %v460 = vld [vmem:[%s192 + $0x138] sm:$0xff]
        %v461 = vld [vmem:[%s192 + $0x140] sm:$0xff]
        %v462 = vld [vmem:[%s192 + $0x150] sm:$0xff]
        %v463 = vld [vmem:[%s192 + $0x158] sm:$0xff]
        %v464 = vld [vmem:[%s192 + $0x168] sm:$0xff]
        %v465 = vld [vmem:[%s192 + $0x170] sm:$0xff]
        %v466 = vpack.c.bf16 %v435, %v434
        %v467 = vpack.c.bf16 %v437, %v436
        %v468 = vpack.c.bf16 %v439, %v438
        %v469 = vpack.c.bf16 %v441, %v440
        %v470 = vpack.c.bf16 %v443, %v442
        %v471 = vpack.c.bf16 %v445, %v444
        %v472 = vpack.c.bf16 %v447, %v446
        %v473 = vpack.c.bf16 %v449, %v448
        %v474 = vpack.c.bf16 %v451, %v450
        %v475 = vpack.c.bf16 %v453, %v452
        %v476 = vpack.c.bf16 %v455, %v454
        %v477 = vpack.c.bf16 %v457, %v456
        %v478 = vpack.c.bf16 %v459, %v458
        %v479 = vpack.c.bf16 %v461, %v460
        %v480 = vpack.c.bf16 %v463, %v462
        %v481 = vpack.c.bf16 %v465, %v464
        %v482 = vld [vmem:[%s192 + $0x1] sm:$0xff]
        %v483 = vld [vmem:[%s192 + $0x9] sm:$0xff]
        %v484 = vld [vmem:[%s192 + $0x19] sm:$0xff]
        %v485 = vld [vmem:[%s192 + $0x21] sm:$0xff]
        %v486 = vld [vmem:[%s192 + $0x31] sm:$0xff]
        %v487 = vld [vmem:[%s192 + $0x39] sm:$0xff]
        %v488 = vld [vmem:[%s192 + $0x49] sm:$0xff]
        %v489 = vld [vmem:[%s192 + $0x51] sm:$0xff]
        %v490 = vld [vmem:[%s192 + $0x61] sm:$0xff]
        %v491 = vld [vmem:[%s192 + $0x69] sm:$0xff]
        %v492 = vld [vmem:[%s192 + $0x79] sm:$0xff]
        %v493 = vld [vmem:[%s192 + $0x81] sm:$0xff]
        %v494 = vld [vmem:[%s192 + $0x91] sm:$0xff]
        %v495 = vld [vmem:[%s192 + $0x99] sm:$0xff]
        %v496 = vld [vmem:[%s192 + $0xa9] sm:$0xff]
        %v497 = vld [vmem:[%s192 + $0xb1] sm:$0xff]
        %v498 = vld [vmem:[%s192 + $0xc1] sm:$0xff]
        %v499 = vld [vmem:[%s192 + $0xc9] sm:$0xff]
        %v500 = vld [vmem:[%s192 + $0xd9] sm:$0xff]
        %v501 = vld [vmem:[%s192 + $0xe1] sm:$0xff]
        %v502 = vld [vmem:[%s192 + $0xf1] sm:$0xff]
        %v503 = vld [vmem:[%s192 + $0xf9] sm:$0xff]
        %v504 = vld [vmem:[%s192 + $0x109] sm:$0xff]
        %v505 = vld [vmem:[%s192 + $0x111] sm:$0xff]
        %v506 = vld [vmem:[%s192 + $0x121] sm:$0xff]
        %v507 = vld [vmem:[%s192 + $0x129] sm:$0xff]
        %v508 = vld [vmem:[%s192 + $0x139] sm:$0xff]
        %v509 = vld [vmem:[%s192 + $0x141] sm:$0xff]
        %v510 = vld [vmem:[%s192 + $0x151] sm:$0xff]
        %v511 = vld [vmem:[%s192 + $0x159] sm:$0xff]
        %v512 = vld [vmem:[%s192 + $0x169] sm:$0xff]
        %v513 = vld [vmem:[%s192 + $0x171] sm:$0xff]
        %v514 = vpack.c.bf16 %v483, %v482
        %v515 = vpack.c.bf16 %v485, %v484
        %v516 = vpack.c.bf16 %v487, %v486
        %v517 = vpack.c.bf16 %v489, %v488
        %v518 = vpack.c.bf16 %v491, %v490
        %v519 = vpack.c.bf16 %v493, %v492
        %v520 = vpack.c.bf16 %v495, %v494
        %v521 = vpack.c.bf16 %v497, %v496
        %v522 = vpack.c.bf16 %v499, %v498
        %v523 = vpack.c.bf16 %v501, %v500
        %v524 = vpack.c.bf16 %v503, %v502
        %v525 = vpack.c.bf16 %v505, %v504
        %v526 = vpack.c.bf16 %v507, %v506
        %v527 = vpack.c.bf16 %v509, %v508
        %v528 = vpack.c.bf16 %v511, %v510
        %v529 = vpack.c.bf16 %v513, %v512
        %v530 = vld [vmem:[%s192 + $0x2] sm:$0xff]
        %v531 = vld [vmem:[%s192 + $0xa] sm:$0xff]
        %v532 = vld [vmem:[%s192 + $0x1a] sm:$0xff]
        %v533 = vld [vmem:[%s192 + $0x22] sm:$0xff]
        %v534 = vld [vmem:[%s192 + $0x32] sm:$0xff]
        %v535 = vld [vmem:[%s192 + $0x3a] sm:$0xff]
        %v536 = vld [vmem:[%s192 + $0x4a] sm:$0xff]
        %v537 = vld [vmem:[%s192 + $0x52] sm:$0xff]
        %v538 = vld [vmem:[%s192 + $0x62] sm:$0xff]
        %v539 = vld [vmem:[%s192 + $0x6a] sm:$0xff]
        %v540 = vld [vmem:[%s192 + $0x7a] sm:$0xff]
        %v541 = vld [vmem:[%s192 + $0x82] sm:$0xff]
        %v542 = vld [vmem:[%s192 + $0x92] sm:$0xff]
        %v543 = vld [vmem:[%s192 + $0x9a] sm:$0xff]
        %v544 = vld [vmem:[%s192 + $0xaa] sm:$0xff]
        %v545 = vld [vmem:[%s192 + $0xb2] sm:$0xff]
        %v546 = vld [vmem:[%s192 + $0xc2] sm:$0xff]
        %v547 = vld [vmem:[%s192 + $0xca] sm:$0xff]
        %v548 = vld [vmem:[%s192 + $0xda] sm:$0xff]
        %v549 = vld [vmem:[%s192 + $0xe2] sm:$0xff]
        %v550 = vld [vmem:[%s192 + $0xf2] sm:$0xff]
        %v551 = vld [vmem:[%s192 + $0xfa] sm:$0xff]
        %v552 = vld [vmem:[%s192 + $0x10a] sm:$0xff]
        %v553 = vld [vmem:[%s192 + $0x112] sm:$0xff]
        %v554 = vld [vmem:[%s192 + $0x122] sm:$0xff]
        %v555 = vld [vmem:[%s192 + $0x12a] sm:$0xff]
        %v556 = vld [vmem:[%s192 + $0x13a] sm:$0xff]
        %v557 = vld [vmem:[%s192 + $0x142] sm:$0xff]
        %v558 = vld [vmem:[%s192 + $0x152] sm:$0xff]
        %v559 = vld [vmem:[%s192 + $0x15a] sm:$0xff]
        %v560 = vld [vmem:[%s192 + $0x16a] sm:$0xff]
        %v561 = vld [vmem:[%s192 + $0x172] sm:$0xff]
        %v562 = vpack.c.bf16 %v531, %v530
        %v563 = vpack.c.bf16 %v533, %v532
        %v564 = vpack.c.bf16 %v535, %v534
        %v565 = vpack.c.bf16 %v537, %v536
        %v566 = vpack.c.bf16 %v539, %v538
        %v567 = vpack.c.bf16 %v541, %v540
        %v568 = vpack.c.bf16 %v543, %v542
        %v569 = vpack.c.bf16 %v545, %v544
        %v570 = vpack.c.bf16 %v547, %v546
        %v571 = vpack.c.bf16 %v549, %v548
        %v572 = vpack.c.bf16 %v551, %v550
        %v573 = vpack.c.bf16 %v553, %v552
        %v574 = vpack.c.bf16 %v555, %v554
        %v575 = vpack.c.bf16 %v557, %v556
        %v576 = vpack.c.bf16 %v559, %v558
        %v577 = vpack.c.bf16 %v561, %v560
        %s578 = scalar_lea.vmem [#allocation2], 48
        %v579 = vld [vmem:[%s578] sm:$0xff]
        %v580 = vld [vmem:[%s578 + $0x8] sm:$0xff]
        %v581 = vld [vmem:[%s578 + $0x18] sm:$0xff]
        %v582 = vld [vmem:[%s578 + $0x20] sm:$0xff]
        %v583 = vld [vmem:[%s578 + $0x30] sm:$0xff]
        %v584 = vld [vmem:[%s578 + $0x38] sm:$0xff]
        %v585 = vld [vmem:[%s578 + $0x48] sm:$0xff]
        %v586 = vld [vmem:[%s578 + $0x50] sm:$0xff]
        %v587 = vld [vmem:[%s578 + $0x60] sm:$0xff]
        %v588 = vld [vmem:[%s578 + $0x68] sm:$0xff]
        %v589 = vld [vmem:[%s578 + $0x78] sm:$0xff]
        %v590 = vld [vmem:[%s578 + $0x80] sm:$0xff]
        %v591 = vld [vmem:[%s578 + $0x90] sm:$0xff]
        %v592 = vld [vmem:[%s578 + $0x98] sm:$0xff]
        %v593 = vld [vmem:[%s578 + $0xa8] sm:$0xff]
        %v594 = vld [vmem:[%s578 + $0xb0] sm:$0xff]
        %v595 = vld [vmem:[%s578 + $0xc0] sm:$0xff]
        %v596 = vld [vmem:[%s578 + $0xc8] sm:$0xff]
        %v597 = vld [vmem:[%s578 + $0xd8] sm:$0xff]
        %v598 = vld [vmem:[%s578 + $0xe0] sm:$0xff]
        %v599 = vld [vmem:[%s578 + $0xf0] sm:$0xff]
        %v600 = vld [vmem:[%s578 + $0xf8] sm:$0xff]
        %v601 = vld [vmem:[%s578 + $0x108] sm:$0xff]
        %v602 = vld [vmem:[%s578 + $0x110] sm:$0xff]
        %v603 = vld [vmem:[%s578 + $0x120] sm:$0xff]
        %v604 = vld [vmem:[%s578 + $0x128] sm:$0xff]
        %v605 = vld [vmem:[%s578 + $0x138] sm:$0xff]
        %v606 = vld [vmem:[%s578 + $0x140] sm:$0xff]
        %v607 = vld [vmem:[%s578 + $0x150] sm:$0xff]
        %v608 = vld [vmem:[%s578 + $0x158] sm:$0xff]
        %v609 = vld [vmem:[%s578 + $0x168] sm:$0xff]
        %v610 = vld [vmem:[%s578 + $0x170] sm:$0xff]
        %v611 = vpack.c.bf16 %v580, %v579
        %v612 = vpack.c.bf16 %v582, %v581
        %v613 = vpack.c.bf16 %v584, %v583
        %v614 = vpack.c.bf16 %v586, %v585
        %v615 = vpack.c.bf16 %v588, %v587
        %v616 = vpack.c.bf16 %v590, %v589
        %v617 = vpack.c.bf16 %v592, %v591
        %v618 = vpack.c.bf16 %v594, %v593
        %v619 = vpack.c.bf16 %v596, %v595
        %v620 = vpack.c.bf16 %v598, %v597
        %v621 = vpack.c.bf16 %v600, %v599
        %v622 = vpack.c.bf16 %v602, %v601
        %v623 = vpack.c.bf16 %v604, %v603
        %v624 = vpack.c.bf16 %v606, %v605
        %v625 = vpack.c.bf16 %v608, %v607
        %v626 = vpack.c.bf16 %v610, %v609
        %v627 = vld [vmem:[%s578 + $0x1] sm:$0xff]
        %v628 = vld [vmem:[%s578 + $0x9] sm:$0xff]
        %v629 = vld [vmem:[%s578 + $0x19] sm:$0xff]
        %v630 = vld [vmem:[%s578 + $0x21] sm:$0xff]
        %v631 = vld [vmem:[%s578 + $0x31] sm:$0xff]
        %v632 = vld [vmem:[%s578 + $0x39] sm:$0xff]
        %v633 = vld [vmem:[%s578 + $0x49] sm:$0xff]
        %v634 = vld [vmem:[%s578 + $0x51] sm:$0xff]
        %v635 = vld [vmem:[%s578 + $0x61] sm:$0xff]
        %v636 = vld [vmem:[%s578 + $0x69] sm:$0xff]
        %v637 = vld [vmem:[%s578 + $0x79] sm:$0xff]
        %v638 = vld [vmem:[%s578 + $0x81] sm:$0xff]
        %v639 = vld [vmem:[%s578 + $0x91] sm:$0xff]
        %v640 = vld [vmem:[%s578 + $0x99] sm:$0xff]
        %v641 = vld [vmem:[%s578 + $0xa9] sm:$0xff]
        %v642 = vld [vmem:[%s578 + $0xb1] sm:$0xff]
        %v643 = vld [vmem:[%s578 + $0xc1] sm:$0xff]
        %v644 = vld [vmem:[%s578 + $0xc9] sm:$0xff]
        %v645 = vld [vmem:[%s578 + $0xd9] sm:$0xff]
        %v646 = vld [vmem:[%s578 + $0xe1] sm:$0xff]
        %v647 = vld [vmem:[%s578 + $0xf1] sm:$0xff]
        %v648 = vld [vmem:[%s578 + $0xf9] sm:$0xff]
        %v649 = vld [vmem:[%s578 + $0x109] sm:$0xff]
        %v650 = vld [vmem:[%s578 + $0x111] sm:$0xff]
        %v651 = vld [vmem:[%s578 + $0x121] sm:$0xff]
        %v652 = vld [vmem:[%s578 + $0x129] sm:$0xff]
        %v653 = vld [vmem:[%s578 + $0x139] sm:$0xff]
        %v654 = vld [vmem:[%s578 + $0x141] sm:$0xff]
        %v655 = vld [vmem:[%s578 + $0x151] sm:$0xff]
        %v656 = vld [vmem:[%s578 + $0x159] sm:$0xff]
        %v657 = vld [vmem:[%s578 + $0x169] sm:$0xff]
        %v658 = vld [vmem:[%s578 + $0x171] sm:$0xff]
        %v659 = vpack.c.bf16 %v628, %v627
        %v660 = vpack.c.bf16 %v630, %v629
        %v661 = vpack.c.bf16 %v632, %v631
        %v662 = vpack.c.bf16 %v634, %v633
        %v663 = vpack.c.bf16 %v636, %v635
        %v664 = vpack.c.bf16 %v638, %v637
        %v665 = vpack.c.bf16 %v640, %v639
        %v666 = vpack.c.bf16 %v642, %v641
        %v667 = vpack.c.bf16 %v644, %v643
        %v668 = vpack.c.bf16 %v646, %v645
        %v669 = vpack.c.bf16 %v648, %v647
        %v670 = vpack.c.bf16 %v650, %v649
        %v671 = vpack.c.bf16 %v652, %v651
        %v672 = vpack.c.bf16 %v654, %v653
        %v673 = vpack.c.bf16 %v656, %v655
        %v674 = vpack.c.bf16 %v658, %v657
        %v675 = vld [vmem:[%s578 + $0x2] sm:$0xff]
        %v676 = vld [vmem:[%s578 + $0xa] sm:$0xff]
        %v677 = vld [vmem:[%s578 + $0x1a] sm:$0xff]
        %v678 = vld [vmem:[%s578 + $0x22] sm:$0xff]
        %v679 = vld [vmem:[%s578 + $0x32] sm:$0xff]
        %v680 = vld [vmem:[%s578 + $0x3a] sm:$0xff]
        %v681 = vld [vmem:[%s578 + $0x4a] sm:$0xff]
        %v682 = vld [vmem:[%s578 + $0x52] sm:$0xff]
        %v683 = vld [vmem:[%s578 + $0x62] sm:$0xff]
        %v684 = vld [vmem:[%s578 + $0x6a] sm:$0xff]
        %v685 = vld [vmem:[%s578 + $0x7a] sm:$0xff]
        %v686 = vld [vmem:[%s578 + $0x82] sm:$0xff]
        %v687 = vld [vmem:[%s578 + $0x92] sm:$0xff]
        %v688 = vld [vmem:[%s578 + $0x9a] sm:$0xff]
        %v689 = vld [vmem:[%s578 + $0xaa] sm:$0xff]
        %v690 = vld [vmem:[%s578 + $0xb2] sm:$0xff]
        %v691 = vld [vmem:[%s578 + $0xc2] sm:$0xff]
        %v692 = vld [vmem:[%s578 + $0xca] sm:$0xff]
        %v693 = vld [vmem:[%s578 + $0xda] sm:$0xff]
        %v694 = vld [vmem:[%s578 + $0xe2] sm:$0xff]
        %v695 = vld [vmem:[%s578 + $0xf2] sm:$0xff]
        %v696 = vld [vmem:[%s578 + $0xfa] sm:$0xff]
        %v697 = vld [vmem:[%s578 + $0x10a] sm:$0xff]
        %v698 = vld [vmem:[%s578 + $0x112] sm:$0xff]
        %v699 = vld [vmem:[%s578 + $0x122] sm:$0xff]
        %v700 = vld [vmem:[%s578 + $0x12a] sm:$0xff]
        %v701 = vld [vmem:[%s578 + $0x13a] sm:$0xff]
        %v702 = vld [vmem:[%s578 + $0x142] sm:$0xff]
        %v703 = vld [vmem:[%s578 + $0x152] sm:$0xff]
        %v704 = vld [vmem:[%s578 + $0x15a] sm:$0xff]
        %v705 = vld [vmem:[%s578 + $0x16a] sm:$0xff]
        %v706 = vld [vmem:[%s578 + $0x172] sm:$0xff]
        %v707 = vpack.c.bf16 %v676, %v675
        %v708 = vpack.c.bf16 %v678, %v677
        %v709 = vpack.c.bf16 %v680, %v679
        %v710 = vpack.c.bf16 %v682, %v681
        %v711 = vpack.c.bf16 %v684, %v683
        %v712 = vpack.c.bf16 %v686, %v685
        %v713 = vpack.c.bf16 %v688, %v687
        %v714 = vpack.c.bf16 %v690, %v689
        %v715 = vpack.c.bf16 %v692, %v691
        %v716 = vpack.c.bf16 %v694, %v693
        %v717 = vpack.c.bf16 %v696, %v695
        %v718 = vpack.c.bf16 %v698, %v697
        %v719 = vpack.c.bf16 %v700, %v699
        %v720 = vpack.c.bf16 %v702, %v701
        %v721 = vpack.c.bf16 %v704, %v703
        %v722 = vpack.c.bf16 %v706, %v705
        %739 = vrot.lane.b32.xlu0 %v370, 4
        %v740 = vpop.permute.xlu0 %739
        %741 = vrot.lane.b32.xlu0 %v371, 4
        %v742 = vpop.permute.xlu0 %741
        %743 = vrot.lane.b32.xlu0 %v372, 4
        %v744 = vpop.permute.xlu0 %743
        %745 = vrot.lane.b32.xlu0 %v373, 4
        %v746 = vpop.permute.xlu0 %745
        %747 = vrot.lane.b32.xlu0 %v374, 4
        %v748 = vpop.permute.xlu0 %747
        %749 = vrot.lane.b32.xlu0 %v375, 4
        %v750 = vpop.permute.xlu0 %749
        %751 = vrot.lane.b32.xlu0 %v376, 4
        %v752 = vpop.permute.xlu0 %751
        %753 = vrot.lane.b32.xlu0 %v377, 4
        %v754 = vpop.permute.xlu0 %753
        %755 = vrot.lane.b32.xlu0 %v378, 4
        %v756 = vpop.permute.xlu0 %755
        %757 = vrot.lane.b32.xlu0 %v379, 4
        %v758 = vpop.permute.xlu0 %757
        %759 = vrot.lane.b32.xlu0 %v380, 4
        %v760 = vpop.permute.xlu0 %759
        %761 = vrot.lane.b32.xlu0 %v381, 4
        %v762 = vpop.permute.xlu0 %761
        %763 = vrot.lane.b32.xlu0 %v382, 4
        %v764 = vpop.permute.xlu0 %763
        %765 = vrot.lane.b32.xlu0 %v383, 4
        %v766 = vpop.permute.xlu0 %765
        %767 = vrot.lane.b32.xlu0 %v384, 4
        %v768 = vpop.permute.xlu0 %767
        %769 = vrot.lane.b32.xlu0 %v385, 4
        %v770 = vpop.permute.xlu0 %769
        %787 = vrot.lane.b32.xlu0 %v418, 8
        %v788 = vpop.permute.xlu0 %787
        %789 = vrot.lane.b32.xlu0 %v419, 8
        %v790 = vpop.permute.xlu0 %789
        %791 = vrot.lane.b32.xlu0 %v420, 8
        %v792 = vpop.permute.xlu0 %791
        %793 = vrot.lane.b32.xlu0 %v421, 8
        %v794 = vpop.permute.xlu0 %793
        %795 = vrot.lane.b32.xlu0 %v422, 8
        %v796 = vpop.permute.xlu0 %795
        %797 = vrot.lane.b32.xlu0 %v423, 8
        %v798 = vpop.permute.xlu0 %797
        %799 = vrot.lane.b32.xlu0 %v424, 8
        %v800 = vpop.permute.xlu0 %799
        %801 = vrot.lane.b32.xlu0 %v425, 8
        %v802 = vpop.permute.xlu0 %801
        %803 = vrot.lane.b32.xlu0 %v426, 8
        %v804 = vpop.permute.xlu0 %803
        %805 = vrot.lane.b32.xlu0 %v427, 8
        %v806 = vpop.permute.xlu0 %805
        %807 = vrot.lane.b32.xlu0 %v428, 8
        %v808 = vpop.permute.xlu0 %807
        %809 = vrot.lane.b32.xlu0 %v429, 8
        %v810 = vpop.permute.xlu0 %809
        %811 = vrot.lane.b32.xlu0 %v430, 8
        %v812 = vpop.permute.xlu0 %811
        %813 = vrot.lane.b32.xlu0 %v431, 8
        %v814 = vpop.permute.xlu0 %813
        %815 = vrot.lane.b32.xlu0 %v432, 8
        %v816 = vpop.permute.xlu0 %815
        %817 = vrot.lane.b32.xlu0 %v433, 8
        %v818 = vpop.permute.xlu0 %817
        %835 = vrot.lane.b32.xlu0 %v466, 12
        %v836 = vpop.permute.xlu0 %835
        %837 = vrot.lane.b32.xlu0 %v467, 12
        %v838 = vpop.permute.xlu0 %837
        %839 = vrot.lane.b32.xlu0 %v468, 12
        %v840 = vpop.permute.xlu0 %839
        %841 = vrot.lane.b32.xlu0 %v469, 12
        %v842 = vpop.permute.xlu0 %841
        %843 = vrot.lane.b32.xlu0 %v470, 12
        %v844 = vpop.permute.xlu0 %843
        %845 = vrot.lane.b32.xlu0 %v471, 12
        %v846 = vpop.permute.xlu0 %845
        %847 = vrot.lane.b32.xlu0 %v472, 12
        %v848 = vpop.permute.xlu0 %847
        %849 = vrot.lane.b32.xlu0 %v473, 12
        %v850 = vpop.permute.xlu0 %849
        %851 = vrot.lane.b32.xlu0 %v474, 12
        %v852 = vpop.permute.xlu0 %851
        %853 = vrot.lane.b32.xlu0 %v475, 12
        %v854 = vpop.permute.xlu0 %853
        %855 = vrot.lane.b32.xlu0 %v476, 12
        %v856 = vpop.permute.xlu0 %855
        %857 = vrot.lane.b32.xlu0 %v477, 12
        %v858 = vpop.permute.xlu0 %857
        %859 = vrot.lane.b32.xlu0 %v478, 12
        %v860 = vpop.permute.xlu0 %859
        %861 = vrot.lane.b32.xlu0 %v479, 12
        %v862 = vpop.permute.xlu0 %861
        %863 = vrot.lane.b32.xlu0 %v480, 12
        %v864 = vpop.permute.xlu0 %863
        %865 = vrot.lane.b32.xlu0 %v481, 12
        %v866 = vpop.permute.xlu0 %865
        %883 = vrot.lane.b32.xlu0 %v514, 16
        %v884 = vpop.permute.xlu0 %883
        %885 = vrot.lane.b32.xlu0 %v515, 16
        %v886 = vpop.permute.xlu0 %885
        %887 = vrot.lane.b32.xlu0 %v516, 16
        %v888 = vpop.permute.xlu0 %887
        %889 = vrot.lane.b32.xlu0 %v517, 16
        %v890 = vpop.permute.xlu0 %889
        %891 = vrot.lane.b32.xlu0 %v518, 16
        %v892 = vpop.permute.xlu0 %891
        %893 = vrot.lane.b32.xlu0 %v519, 16
        %v894 = vpop.permute.xlu0 %893
        %895 = vrot.lane.b32.xlu0 %v520, 16
        %v896 = vpop.permute.xlu0 %895
        %897 = vrot.lane.b32.xlu0 %v521, 16
        %v898 = vpop.permute.xlu0 %897
        %899 = vrot.lane.b32.xlu0 %v522, 16
        %v900 = vpop.permute.xlu0 %899
        %901 = vrot.lane.b32.xlu0 %v523, 16
        %v902 = vpop.permute.xlu0 %901
        %903 = vrot.lane.b32.xlu0 %v524, 16
        %v904 = vpop.permute.xlu0 %903
        %905 = vrot.lane.b32.xlu0 %v525, 16
        %v906 = vpop.permute.xlu0 %905
        %907 = vrot.lane.b32.xlu0 %v526, 16
        %v908 = vpop.permute.xlu0 %907
        %909 = vrot.lane.b32.xlu0 %v527, 16
        %v910 = vpop.permute.xlu0 %909
        %911 = vrot.lane.b32.xlu0 %v528, 16
        %v912 = vpop.permute.xlu0 %911
        %913 = vrot.lane.b32.xlu0 %v529, 16
        %v914 = vpop.permute.xlu0 %913
        %931 = vrot.lane.b32.xlu0 %v562, 20
        %v932 = vpop.permute.xlu0 %931
        %933 = vrot.lane.b32.xlu0 %v563, 20
        %v934 = vpop.permute.xlu0 %933
        %935 = vrot.lane.b32.xlu0 %v564, 20
        %v936 = vpop.permute.xlu0 %935
        %937 = vrot.lane.b32.xlu0 %v565, 20
        %v938 = vpop.permute.xlu0 %937
        %939 = vrot.lane.b32.xlu0 %v566, 20
        %v940 = vpop.permute.xlu0 %939
        %941 = vrot.lane.b32.xlu0 %v567, 20
        %v942 = vpop.permute.xlu0 %941
        %943 = vrot.lane.b32.xlu0 %v568, 20
        %v944 = vpop.permute.xlu0 %943
        %945 = vrot.lane.b32.xlu0 %v569, 20
        %v946 = vpop.permute.xlu0 %945
        %947 = vrot.lane.b32.xlu0 %v570, 20
        %v948 = vpop.permute.xlu0 %947
        %949 = vrot.lane.b32.xlu0 %v571, 20
        %v950 = vpop.permute.xlu0 %949
        %951 = vrot.lane.b32.xlu0 %v572, 20
        %v952 = vpop.permute.xlu0 %951
        %953 = vrot.lane.b32.xlu0 %v573, 20
        %v954 = vpop.permute.xlu0 %953
        %955 = vrot.lane.b32.xlu0 %v574, 20
        %v956 = vpop.permute.xlu0 %955
        %957 = vrot.lane.b32.xlu0 %v575, 20
        %v958 = vpop.permute.xlu0 %957
        %959 = vrot.lane.b32.xlu0 %v576, 20
        %v960 = vpop.permute.xlu0 %959
        %961 = vrot.lane.b32.xlu0 %v577, 20
        %v962 = vpop.permute.xlu0 %961
        %979 = vrot.lane.b32.xlu0 %v611, 24
        %v980 = vpop.permute.xlu0 %979
        %981 = vrot.lane.b32.xlu0 %v612, 24
        %v982 = vpop.permute.xlu0 %981
        %983 = vrot.lane.b32.xlu0 %v613, 24
        %v984 = vpop.permute.xlu0 %983
        %985 = vrot.lane.b32.xlu0 %v614, 24
        %v986 = vpop.permute.xlu0 %985
        %987 = vrot.lane.b32.xlu0 %v615, 24
        %v988 = vpop.permute.xlu0 %987
        %989 = vrot.lane.b32.xlu0 %v616, 24
        %v990 = vpop.permute.xlu0 %989
        %991 = vrot.lane.b32.xlu0 %v617, 24
        %v992 = vpop.permute.xlu0 %991
        %993 = vrot.lane.b32.xlu0 %v618, 24
        %v994 = vpop.permute.xlu0 %993
        %995 = vrot.lane.b32.xlu0 %v619, 24
        %v996 = vpop.permute.xlu0 %995
        %997 = vrot.lane.b32.xlu0 %v620, 24
        %v998 = vpop.permute.xlu0 %997
        %999 = vrot.lane.b32.xlu0 %v621, 24
        %v1000 = vpop.permute.xlu0 %999
        %1001 = vrot.lane.b32.xlu0 %v622, 24
        %v1002 = vpop.permute.xlu0 %1001
        %1003 = vrot.lane.b32.xlu0 %v623, 24
        %v1004 = vpop.permute.xlu0 %1003
        %1005 = vrot.lane.b32.xlu0 %v624, 24
        %v1006 = vpop.permute.xlu0 %1005
        %1007 = vrot.lane.b32.xlu0 %v625, 24
        %v1008 = vpop.permute.xlu0 %1007
        %1009 = vrot.lane.b32.xlu0 %v626, 24
        %v1010 = vpop.permute.xlu0 %1009
        %1027 = vrot.lane.b32.xlu0 %v659, 28
        %v1028 = vpop.permute.xlu0 %1027
        %1029 = vrot.lane.b32.xlu0 %v660, 28
        %v1030 = vpop.permute.xlu0 %1029
        %1031 = vrot.lane.b32.xlu0 %v661, 28
        %v1032 = vpop.permute.xlu0 %1031
        %1033 = vrot.lane.b32.xlu0 %v662, 28
        %v1034 = vpop.permute.xlu0 %1033
        %1035 = vrot.lane.b32.xlu0 %v663, 28
        %v1036 = vpop.permute.xlu0 %1035
        %1037 = vrot.lane.b32.xlu0 %v664, 28
        %v1038 = vpop.permute.xlu0 %1037
        %1039 = vrot.lane.b32.xlu0 %v665, 28
        %v1040 = vpop.permute.xlu0 %1039
        %1041 = vrot.lane.b32.xlu0 %v666, 28
        %v1042 = vpop.permute.xlu0 %1041
        %1043 = vrot.lane.b32.xlu0 %v667, 28
        %v1044 = vpop.permute.xlu0 %1043
        %1045 = vrot.lane.b32.xlu0 %v668, 28
        %v1046 = vpop.permute.xlu0 %1045
        %1047 = vrot.lane.b32.xlu0 %v669, 28
        %v1048 = vpop.permute.xlu0 %1047
        %1049 = vrot.lane.b32.xlu0 %v670, 28
        %v1050 = vpop.permute.xlu0 %1049
        %1051 = vrot.lane.b32.xlu0 %v671, 28
        %v1052 = vpop.permute.xlu0 %1051
        %1053 = vrot.lane.b32.xlu0 %v672, 28
        %v1054 = vpop.permute.xlu0 %1053
        %1055 = vrot.lane.b32.xlu0 %v673, 28
        %v1056 = vpop.permute.xlu0 %1055
        %1057 = vrot.lane.b32.xlu0 %v674, 28
        %v1058 = vpop.permute.xlu0 %1057
        %1075 = vrot.lane.b32.xlu0 %v707, 32
        %v1076 = vpop.permute.xlu0 %1075
        %1077 = vrot.lane.b32.xlu0 %v708, 32
        %v1078 = vpop.permute.xlu0 %1077
        %1079 = vrot.lane.b32.xlu0 %v709, 32
        %v1080 = vpop.permute.xlu0 %1079
        %1081 = vrot.lane.b32.xlu0 %v710, 32
        %v1082 = vpop.permute.xlu0 %1081
        %1083 = vrot.lane.b32.xlu0 %v711, 32
        %v1084 = vpop.permute.xlu0 %1083
        %1085 = vrot.lane.b32.xlu0 %v712, 32
        %v1086 = vpop.permute.xlu0 %1085
        %1087 = vrot.lane.b32.xlu0 %v713, 32
        %v1088 = vpop.permute.xlu0 %1087
        %1089 = vrot.lane.b32.xlu0 %v714, 32
        %v1090 = vpop.permute.xlu0 %1089
        %1091 = vrot.lane.b32.xlu0 %v715, 32
        %v1092 = vpop.permute.xlu0 %1091
        %1093 = vrot.lane.b32.xlu0 %v716, 32
        %v1094 = vpop.permute.xlu0 %1093
        %1095 = vrot.lane.b32.xlu0 %v717, 32
        %v1096 = vpop.permute.xlu0 %1095
        %1097 = vrot.lane.b32.xlu0 %v718, 32
        %v1098 = vpop.permute.xlu0 %1097
        %1099 = vrot.lane.b32.xlu0 %v719, 32
        %v1100 = vpop.permute.xlu0 %1099
        %1101 = vrot.lane.b32.xlu0 %v720, 32
        %v1102 = vpop.permute.xlu0 %1101
        %1103 = vrot.lane.b32.xlu0 %v721, 32
        %v1104 = vpop.permute.xlu0 %1103
        %1105 = vrot.lane.b32.xlu0 %v722, 32
        %v1106 = vpop.permute.xlu0 %1105
        %v1109 = vsel %vm183, %v322, %v740
        %v1112 = vsel %vm183, %v323, %v742
        %v1115 = vsel %vm183, %v324, %v744
        %v1118 = vsel %vm183, %v325, %v746
        %v1121 = vsel %vm183, %v326, %v748
        %v1124 = vsel %vm183, %v327, %v750
        %v1127 = vsel %vm183, %v328, %v752
        %v1130 = vsel %vm183, %v329, %v754
        %v1133 = vsel %vm183, %v330, %v756
        %v1136 = vsel %vm183, %v331, %v758
        %v1139 = vsel %vm183, %v332, %v760
        %v1142 = vsel %vm183, %v333, %v762
        %v1145 = vsel %vm183, %v334, %v764
        %v1148 = vsel %vm183, %v335, %v766
        %v1151 = vsel %vm183, %v336, %v768
        %v1154 = vsel %vm183, %v337, %v770
        %vm1155 = vcmask 64512
        %v1157 = vsel %vm1155, %v1109, %v788
        %v1159 = vsel %vm1155, %v1112, %v790
        %v1161 = vsel %vm1155, %v1115, %v792
        %v1163 = vsel %vm1155, %v1118, %v794
        %v1165 = vsel %vm1155, %v1121, %v796
        %v1167 = vsel %vm1155, %v1124, %v798
        %v1169 = vsel %vm1155, %v1127, %v800
        %v1171 = vsel %vm1155, %v1130, %v802
        %v1173 = vsel %vm1155, %v1133, %v804
        %v1175 = vsel %vm1155, %v1136, %v806
        %v1177 = vsel %vm1155, %v1139, %v808
        %v1179 = vsel %vm1155, %v1142, %v810
        %v1181 = vsel %vm1155, %v1145, %v812
        %v1183 = vsel %vm1155, %v1148, %v814
        %v1185 = vsel %vm1155, %v1151, %v816
        %v1187 = vsel %vm1155, %v1154, %v818
        %vm1188 = vcmask 97280
        %v1190 = vsel %vm1188, %v1157, %v836
        %v1192 = vsel %vm1188, %v1159, %v838
        %v1194 = vsel %vm1188, %v1161, %v840
        %v1196 = vsel %vm1188, %v1163, %v842
        %v1198 = vsel %vm1188, %v1165, %v844
        %v1200 = vsel %vm1188, %v1167, %v846
        %v1202 = vsel %vm1188, %v1169, %v848
        %v1204 = vsel %vm1188, %v1171, %v850
        %v1206 = vsel %vm1188, %v1173, %v852
        %v1208 = vsel %vm1188, %v1175, %v854
        %v1210 = vsel %vm1188, %v1177, %v856
        %v1212 = vsel %vm1188, %v1179, %v858
        %v1214 = vsel %vm1188, %v1181, %v860
        %v1216 = vsel %vm1188, %v1183, %v862
        %v1218 = vsel %vm1188, %v1185, %v864
        %v1220 = vsel %vm1188, %v1187, %v866
        %vm1221 = vcmask 130048
        %v1223 = vsel %vm1221, %v1190, %v884
        %v1225 = vsel %vm1221, %v1192, %v886
        %v1227 = vsel %vm1221, %v1194, %v888
        %v1229 = vsel %vm1221, %v1196, %v890
        %v1231 = vsel %vm1221, %v1198, %v892
        %v1233 = vsel %vm1221, %v1200, %v894
        %v1235 = vsel %vm1221, %v1202, %v896
        %v1237 = vsel %vm1221, %v1204, %v898
        %v1239 = vsel %vm1221, %v1206, %v900
        %v1241 = vsel %vm1221, %v1208, %v902
        %v1243 = vsel %vm1221, %v1210, %v904
        %v1245 = vsel %vm1221, %v1212, %v906
        %v1247 = vsel %vm1221, %v1214, %v908
        %v1249 = vsel %vm1221, %v1216, %v910
        %v1251 = vsel %vm1221, %v1218, %v912
        %v1253 = vsel %vm1221, %v1220, %v914
        %vm1254 = vcmask 162816
        %v1256 = vsel %vm1254, %v1223, %v932
        %v1258 = vsel %vm1254, %v1225, %v934
        %v1260 = vsel %vm1254, %v1227, %v936
        %v1262 = vsel %vm1254, %v1229, %v938
        %v1264 = vsel %vm1254, %v1231, %v940
        %v1266 = vsel %vm1254, %v1233, %v942
        %v1268 = vsel %vm1254, %v1235, %v944
        %v1270 = vsel %vm1254, %v1237, %v946
        %v1272 = vsel %vm1254, %v1239, %v948
        %v1274 = vsel %vm1254, %v1241, %v950
        %v1276 = vsel %vm1254, %v1243, %v952
        %v1278 = vsel %vm1254, %v1245, %v954
        %v1280 = vsel %vm1254, %v1247, %v956
        %v1282 = vsel %vm1254, %v1249, %v958
        %v1284 = vsel %vm1254, %v1251, %v960
        %v1286 = vsel %vm1254, %v1253, %v962
        %vm1287 = vcmask 195584
        %v1289 = vsel %vm1287, %v1256, %v980
        %v1291 = vsel %vm1287, %v1258, %v982
        %v1293 = vsel %vm1287, %v1260, %v984
        %v1295 = vsel %vm1287, %v1262, %v986
        %v1297 = vsel %vm1287, %v1264, %v988
        %v1299 = vsel %vm1287, %v1266, %v990
        %v1301 = vsel %vm1287, %v1268, %v992
        %v1303 = vsel %vm1287, %v1270, %v994
        %v1305 = vsel %vm1287, %v1272, %v996
        %v1307 = vsel %vm1287, %v1274, %v998
        %v1309 = vsel %vm1287, %v1276, %v1000
        %v1311 = vsel %vm1287, %v1278, %v1002
        %v1313 = vsel %vm1287, %v1280, %v1004
        %v1315 = vsel %vm1287, %v1282, %v1006
        %v1317 = vsel %vm1287, %v1284, %v1008
        %v1319 = vsel %vm1287, %v1286, %v1010
        %vm1320 = vcmask 228352
        %v1322 = vsel %vm1320, %v1289, %v1028
        %v1324 = vsel %vm1320, %v1291, %v1030
        %v1326 = vsel %vm1320, %v1293, %v1032
        %v1328 = vsel %vm1320, %v1295, %v1034
        %v1330 = vsel %vm1320, %v1297, %v1036
        %v1332 = vsel %vm1320, %v1299, %v1038
        %v1334 = vsel %vm1320, %v1301, %v1040
        %v1336 = vsel %vm1320, %v1303, %v1042
        %v1338 = vsel %vm1320, %v1305, %v1044
        %v1340 = vsel %vm1320, %v1307, %v1046
        %v1342 = vsel %vm1320, %v1309, %v1048
        %v1344 = vsel %vm1320, %v1311, %v1050
        %v1346 = vsel %vm1320, %v1313, %v1052
        %v1348 = vsel %vm1320, %v1315, %v1054
        %v1350 = vsel %vm1320, %v1317, %v1056
        %v1352 = vsel %vm1320, %v1319, %v1058
        %vm1353 = vcmask 261120
        %v1355 = vsel %vm1353, %v1322, %v1076
        %v1357 = vsel %vm1353, %v1324, %v1078
        %v1359 = vsel %vm1353, %v1326, %v1080
        %v1361 = vsel %vm1353, %v1328, %v1082
        %v1363 = vsel %vm1353, %v1330, %v1084
        %v1365 = vsel %vm1353, %v1332, %v1086
        %v1367 = vsel %vm1353, %v1334, %v1088
        %v1369 = vsel %vm1353, %v1336, %v1090
        %v1371 = vsel %vm1353, %v1338, %v1092
        %v1373 = vsel %vm1353, %v1340, %v1094
        %v1375 = vsel %vm1353, %v1342, %v1096
        %v1377 = vsel %vm1353, %v1344, %v1098
        %v1379 = vsel %vm1353, %v1346, %v1100
        %v1381 = vsel %vm1353, %v1348, %v1102
        %v1383 = vsel %vm1353, %v1350, %v1104
        %v1385 = vsel %vm1353, %v1352, %v1106
        %v1386 = vld [vmem:[%s1] sm:$0xf]
        %v1387 = vld [vmem:[%s1 + $0x4] sm:$0xf]
        %v1388 = vld [vmem:[%s1 + $0x8] sm:$0xf]
        %v1389 = vld [vmem:[%s1 + $0xc] sm:$0xf]
        %v1390 = vld [vmem:[%s1 + $0x10] sm:$0x3]
        %v1396 = vunpack.c.l.b16 %v1386
        %v1397 = vunpack.c.l.b16 %v1387
        %v1398 = vunpack.c.l.b16 %v1388
        %v1399 = vunpack.c.l.b16 %v1389
        %v1400 = vunpack.c.l.b16 %v1390
        %v1401 = vpack.c.b16 %v1397, %v1396
        %v1402 = vpack.c.b16 %v1399, %v1398
        %v1403 = vpack.c.b16 %v1400, %v1400
        %vm1406 = vcmask 293888
        %v1407 = vsel %vm1406, %v1355, 0
        %v1409 = vsel %vm1406, %v1357, 0
        %v1411 = vsel %vm1406, %v1359, 0
        %v1413 = vsel %vm1406, %v1361, 0
        %v1415 = vsel %vm1406, %v1363, 0
        %v1417 = vsel %vm1406, %v1365, 0
        %v1419 = vsel %vm1406, %v1367, 0
        %v1421 = vsel %vm1406, %v1369, 0
        %v1423 = vsel %vm1406, %v1371, 0
        %v1425 = vsel %vm1406, %v1373, 0
        %v1427 = vsel %vm1406, %v1375, 0
        %v1429 = vsel %vm1406, %v1377, 0
        %v1431 = vsel %vm1406, %v1379, 0
        %v1433 = vsel %vm1406, %v1381, 0
        %v1435 = vsel %vm1406, %v1383, 0
        %v1437 = vsel %vm1406, %v1385, 0
        %vm1439 = vcmask 1041408
        %v1441 = vsel %vm1439, %v1403, 0
        %1443 = vmatprep.subr.bf16.mxu0 0
        %1444 = vmatpush1.bf16.msra.mxu0 0
        %1445 = vmatprep.subr.bf16.mxu0 0
        %1446 = vmatpush1.bf16.msra.mxu0 0
        %1447 = vmatprep.subr.bf16.mxu0 0
        %1448 = vmatpush1.bf16.msra.mxu0 0
        %1449 = vmatprep.subr.bf16.mxu0 0
        %1450 = vmatpush1.bf16.msra.mxu0 0
        %1451 = vmatprep.subr.bf16.mxu0 0
        %1452 = vmatpush1.bf16.msra.mxu0 0
        %1453 = vmatprep.subr.bf16.mxu0 0
        %1454 = vmatpush1.bf16.msra.mxu0 %v1441
        %1455 = vmatprep.subr.bf16.mxu0 0
        %1456 = vmatpush1.bf16.msra.mxu0 %v1402
        %1457 = vmatprep.subr.bf16.mxu0 0
        %1458 = vmatpush1.bf16.msra.mxu0 %v1401
        %1459 = vmatprep.subr.bf16.mxu0 0
        %1460 = vmatpush2.bf16.msra.mxu0 0
        %1461 = vmatprep.subr.bf16.mxu0 0
        %1462 = vmatpush2.bf16.msra.mxu0 0
        %1463 = vmatprep.subr.bf16.mxu0 0
        %1464 = vmatpush2.bf16.msra.mxu0 0
        %1465 = vmatprep.subr.bf16.mxu0 0
        %1466 = vmatpush2.bf16.msra.mxu0 0
        %1467 = vmatprep.subr.bf16.mxu0 0
        %1468 = vmatpush2.bf16.msra.mxu0 0
        %1469 = vmatprep.subr.bf16.mxu0 0
        %1470 = vmatpush2.bf16.msra.mxu0 0
        %1471 = vmatprep.subr.bf16.mxu0 0
        %1472 = vmatpush2.bf16.msra.mxu0 0
        %1473 = vmatprep.subr.bf16.mxu0 0
        %1474 = vmatpush2.bf16.msra.mxu0 0
        %1475 = vmatprep.mubr.bf16.mxu0 0
        %1476 = vmatmul.mubr.bf16.gmra.mxu0 %v1407
        %v1477 = vpop.f32.mrf.mxu0
        %v1478 = vadd.f32 0.0, %v1477
        %v1479 = vpop.f32.mrf.mxu0
        %v1480 = vpop.f32.mrf.mxu0
        %v1481 = vadd.f32 0.0, %v1480
        %v1482 = vpop.f32.mrf.mxu0
        %1483 = vmatprep.mubr.bf16.mxu0 0
        %1484 = vmatmul.mubr.bf16.gmra.mxu0 %v1409
        %v1485 = vpop.f32.mrf.mxu0
        %v1486 = vadd.f32 0.0, %v1485
        %v1487 = vpop.f32.mrf.mxu0
        %v1488 = vpop.f32.mrf.mxu0
        %v1489 = vadd.f32 0.0, %v1488
        %v1490 = vpop.f32.mrf.mxu0
        %1491 = vmatprep.mubr.bf16.mxu0 0
        %1492 = vmatmul.mubr.bf16.gmra.mxu0 %v1411
        %v1493 = vpop.f32.mrf.mxu0
        %v1494 = vadd.f32 0.0, %v1493
        %v1495 = vpop.f32.mrf.mxu0
        %v1496 = vpop.f32.mrf.mxu0
        %v1497 = vadd.f32 0.0, %v1496
        %v1498 = vpop.f32.mrf.mxu0
        %1499 = vmatprep.mubr.bf16.mxu0 0
        %1500 = vmatmul.mubr.bf16.gmra.mxu0 %v1413
        %v1501 = vpop.f32.mrf.mxu0
        %v1502 = vadd.f32 0.0, %v1501
        %v1503 = vpop.f32.mrf.mxu0
        %v1504 = vpop.f32.mrf.mxu0
        %v1505 = vadd.f32 0.0, %v1504
        %v1506 = vpop.f32.mrf.mxu0
        %1507 = vmatprep.mubr.bf16.mxu0 0
        %1508 = vmatmul.mubr.bf16.gmra.mxu0 %v1415
        %v1509 = vpop.f32.mrf.mxu0
        %v1510 = vadd.f32 0.0, %v1509
        %v1511 = vpop.f32.mrf.mxu0
        %v1512 = vpop.f32.mrf.mxu0
        %v1513 = vadd.f32 0.0, %v1512
        %v1514 = vpop.f32.mrf.mxu0
        %1515 = vmatprep.mubr.bf16.mxu0 0
        %1516 = vmatmul.mubr.bf16.gmra.mxu0 %v1417
        %v1517 = vpop.f32.mrf.mxu0
        %v1518 = vadd.f32 0.0, %v1517
        %v1519 = vpop.f32.mrf.mxu0
        %v1520 = vpop.f32.mrf.mxu0
        %v1521 = vadd.f32 0.0, %v1520
        %v1522 = vpop.f32.mrf.mxu0
        %1523 = vmatprep.mubr.bf16.mxu0 0
        %1524 = vmatmul.mubr.bf16.gmra.mxu0 %v1419
        %v1525 = vpop.f32.mrf.mxu0
        %v1526 = vadd.f32 0.0, %v1525
        %v1527 = vpop.f32.mrf.mxu0
        %v1528 = vpop.f32.mrf.mxu0
        %v1529 = vadd.f32 0.0, %v1528
        %v1530 = vpop.f32.mrf.mxu0
        %1531 = vmatprep.mubr.bf16.mxu0 0
        %1532 = vmatmul.mubr.bf16.gmra.mxu0 %v1421
        %v1533 = vpop.f32.mrf.mxu0
        %v1534 = vadd.f32 0.0, %v1533
        %v1535 = vpop.f32.mrf.mxu0
        %v1536 = vpop.f32.mrf.mxu0
        %v1537 = vadd.f32 0.0, %v1536
        %v1538 = vpop.f32.mrf.mxu0
        %1539 = vmatprep.mubr.bf16.mxu0 0
        %1540 = vmatmul.mubr.bf16.gmra.mxu0 %v1423
        %v1541 = vpop.f32.mrf.mxu0
        %v1542 = vadd.f32 0.0, %v1541
        %v1543 = vpop.f32.mrf.mxu0
        %v1544 = vpop.f32.mrf.mxu0
        %v1545 = vadd.f32 0.0, %v1544
        %v1546 = vpop.f32.mrf.mxu0
        %1547 = vmatprep.mubr.bf16.mxu0 0
        %1548 = vmatmul.mubr.bf16.gmra.mxu0 %v1425
        %v1549 = vpop.f32.mrf.mxu0
        %v1550 = vadd.f32 0.0, %v1549
        %v1551 = vpop.f32.mrf.mxu0
        %v1552 = vpop.f32.mrf.mxu0
        %v1553 = vadd.f32 0.0, %v1552
        %v1554 = vpop.f32.mrf.mxu0
        %1555 = vmatprep.mubr.bf16.mxu0 0
        %1556 = vmatmul.mubr.bf16.gmra.mxu0 %v1427
        %v1557 = vpop.f32.mrf.mxu0
        %v1558 = vadd.f32 0.0, %v1557
        %v1559 = vpop.f32.mrf.mxu0
        %v1560 = vpop.f32.mrf.mxu0
        %v1561 = vadd.f32 0.0, %v1560
        %v1562 = vpop.f32.mrf.mxu0
        %1563 = vmatprep.mubr.bf16.mxu0 0
        %1564 = vmatmul.mubr.bf16.gmra.mxu0 %v1429
        %v1565 = vpop.f32.mrf.mxu0
        %v1566 = vadd.f32 0.0, %v1565
        %v1567 = vpop.f32.mrf.mxu0
        %v1568 = vpop.f32.mrf.mxu0
        %v1569 = vadd.f32 0.0, %v1568
        %v1570 = vpop.f32.mrf.mxu0
        %1571 = vmatprep.mubr.bf16.mxu0 0
        %1572 = vmatmul.mubr.bf16.gmra.mxu0 %v1431
        %v1573 = vpop.f32.mrf.mxu0
        %v1574 = vadd.f32 0.0, %v1573
        %v1575 = vpop.f32.mrf.mxu0
        %v1576 = vpop.f32.mrf.mxu0
        %v1577 = vadd.f32 0.0, %v1576
        %v1578 = vpop.f32.mrf.mxu0
        %1579 = vmatprep.mubr.bf16.mxu0 0
        %1580 = vmatmul.mubr.bf16.gmra.mxu0 %v1433
        %v1581 = vpop.f32.mrf.mxu0
        %v1582 = vadd.f32 0.0, %v1581
        %v1583 = vpop.f32.mrf.mxu0
        %v1584 = vpop.f32.mrf.mxu0
        %v1585 = vadd.f32 0.0, %v1584
        %v1586 = vpop.f32.mrf.mxu0
        %1587 = vmatprep.mubr.bf16.mxu0 0
        %1588 = vmatmul.mubr.bf16.gmra.mxu0 %v1435
        %v1589 = vpop.f32.mrf.mxu0
        %v1590 = vadd.f32 0.0, %v1589
        %v1591 = vpop.f32.mrf.mxu0
        %v1592 = vpop.f32.mrf.mxu0
        %v1593 = vadd.f32 0.0, %v1592
        %v1594 = vpop.f32.mrf.mxu0
        %1595 = vmatprep.mubr.bf16.mxu0 0
        %1596 = vmatmul.mubr.bf16.gmra.mxu0 %v1437
        %v1597 = vpop.f32.mrf.mxu0
        %v1598 = vadd.f32 0.0, %v1597
        %v1599 = vpop.f32.mrf.mxu0
        %v1600 = vpop.f32.mrf.mxu0
        %v1601 = vadd.f32 0.0, %v1600
        %v1602 = vpop.f32.mrf.mxu0
        %1603 = vdwg.mxu0
        %1604 = vst.msk [vmem:[%s181] sm:$0xff] %vm183, %v1478
        %1605 = vst.msk [vmem:[%s181 + $0x8] sm:$0xff] %vm183, %v1481
        %1606 = vst.msk [vmem:[%s181 + $0x10] sm:$0xff] %vm183, %v1486
        %1607 = vst.msk [vmem:[%s181 + $0x18] sm:$0xff] %vm183, %v1489
        %1608 = vst.msk [vmem:[%s181 + $0x20] sm:$0xff] %vm183, %v1494
        %1609 = vst.msk [vmem:[%s181 + $0x28] sm:$0xff] %vm183, %v1497
        %1610 = vst.msk [vmem:[%s181 + $0x30] sm:$0xff] %vm183, %v1502
        %1611 = vst.msk [vmem:[%s181 + $0x38] sm:$0xff] %vm183, %v1505
        %1612 = vst.msk [vmem:[%s181 + $0x40] sm:$0xff] %vm183, %v1510
        %1613 = vst.msk [vmem:[%s181 + $0x48] sm:$0xff] %vm183, %v1513
        %1614 = vst.msk [vmem:[%s181 + $0x50] sm:$0xff] %vm183, %v1518
        %1615 = vst.msk [vmem:[%s181 + $0x58] sm:$0xff] %vm183, %v1521
        %1616 = vst.msk [vmem:[%s181 + $0x60] sm:$0xff] %vm183, %v1526
        %1617 = vst.msk [vmem:[%s181 + $0x68] sm:$0xff] %vm183, %v1529
        %1618 = vst.msk [vmem:[%s181 + $0x70] sm:$0xff] %vm183, %v1534
        %1619 = vst.msk [vmem:[%s181 + $0x78] sm:$0xff] %vm183, %v1537
        %1620 = vst.msk [vmem:[%s181 + $0x80] sm:$0xff] %vm183, %v1542
        %1621 = vst.msk [vmem:[%s181 + $0x88] sm:$0xff] %vm183, %v1545
        %1622 = vst.msk [vmem:[%s181 + $0x90] sm:$0xff] %vm183, %v1550
        %1623 = vst.msk [vmem:[%s181 + $0x98] sm:$0xff] %vm183, %v1553
        %1624 = vst.msk [vmem:[%s181 + $0xa0] sm:$0xff] %vm183, %v1558
        %1625 = vst.msk [vmem:[%s181 + $0xa8] sm:$0xff] %vm183, %v1561
        %1626 = vst.msk [vmem:[%s181 + $0xb0] sm:$0xff] %vm183, %v1566
        %1627 = vst.msk [vmem:[%s181 + $0xb8] sm:$0xff] %vm183, %v1569
        %1628 = vst.msk [vmem:[%s181 + $0xc0] sm:$0xff] %vm183, %v1574
        %1629 = vst.msk [vmem:[%s181 + $0xc8] sm:$0xff] %vm183, %v1577
        %1630 = vst.msk [vmem:[%s181 + $0xd0] sm:$0xff] %vm183, %v1582
        %1631 = vst.msk [vmem:[%s181 + $0xd8] sm:$0xff] %vm183, %v1585
        %1632 = vst.msk [vmem:[%s181 + $0xe0] sm:$0xff] %vm183, %v1590
        %1633 = vst.msk [vmem:[%s181 + $0xe8] sm:$0xff] %vm183, %v1593
        %1634 = vst.msk [vmem:[%s181 + $0xf0] sm:$0xff] %vm183, %v1598
        %1635 = vst.msk [vmem:[%s181 + $0xf8] sm:$0xff] %vm183, %v1601
        %v1636 = vsel %vm183, %v1478, 0.0
        %v1637 = vsel %vm183, %v1481, 0.0
        %v1638 = vadd.f32 %v1636, %v1637
        %v1639 = vsel %vm183, %v1486, 0.0
        %v1640 = vadd.f32 %v1638, %v1639
        %v1641 = vsel %vm183, %v1489, 0.0
        %v1642 = vadd.f32 %v1640, %v1641
        %v1643 = vsel %vm183, %v1494, 0.0
        %v1644 = vadd.f32 %v1642, %v1643
        %v1645 = vsel %vm183, %v1497, 0.0
        %v1646 = vadd.f32 %v1644, %v1645
        %v1647 = vsel %vm183, %v1502, 0.0
        %v1648 = vadd.f32 %v1646, %v1647
        %v1649 = vsel %vm183, %v1505, 0.0
        %v1650 = vadd.f32 %v1648, %v1649
        %v1651 = vsel %vm183, %v1510, 0.0
        %v1652 = vadd.f32 %v1650, %v1651
        %v1653 = vsel %vm183, %v1513, 0.0
        %v1654 = vadd.f32 %v1652, %v1653
        %v1655 = vsel %vm183, %v1518, 0.0
        %v1656 = vadd.f32 %v1654, %v1655
        %v1657 = vsel %vm183, %v1521, 0.0
        %v1658 = vadd.f32 %v1656, %v1657
        %v1659 = vsel %vm183, %v1526, 0.0
        %v1660 = vadd.f32 %v1658, %v1659
        %v1661 = vsel %vm183, %v1529, 0.0
        %v1662 = vadd.f32 %v1660, %v1661
        %v1663 = vsel %vm183, %v1534, 0.0
        %v1664 = vadd.f32 %v1662, %v1663
        %v1665 = vsel %vm183, %v1537, 0.0
        %v1666 = vadd.f32 %v1664, %v1665
        %v1667 = vsel %vm183, %v1542, 0.0
        %v1668 = vadd.f32 %v1666, %v1667
        %v1669 = vsel %vm183, %v1545, 0.0
        %v1670 = vadd.f32 %v1668, %v1669
        %v1671 = vsel %vm183, %v1550, 0.0
        %v1672 = vadd.f32 %v1670, %v1671
        %v1673 = vsel %vm183, %v1553, 0.0
        %v1674 = vadd.f32 %v1672, %v1673
        %v1675 = vsel %vm183, %v1558, 0.0
        %v1676 = vadd.f32 %v1674, %v1675
        %v1677 = vsel %vm183, %v1561, 0.0
        %v1678 = vadd.f32 %v1676, %v1677
        %v1679 = vsel %vm183, %v1566, 0.0
        %v1680 = vadd.f32 %v1678, %v1679
        %v1681 = vsel %vm183, %v1569, 0.0
        %v1682 = vadd.f32 %v1680, %v1681
        %v1683 = vsel %vm183, %v1574, 0.0
        %v1684 = vadd.f32 %v1682, %v1683
        %v1685 = vsel %vm183, %v1577, 0.0
        %v1686 = vadd.f32 %v1684, %v1685
        %v1687 = vsel %vm183, %v1582, 0.0
        %v1688 = vadd.f32 %v1686, %v1687
        %v1689 = vsel %vm183, %v1585, 0.0
        %v1690 = vadd.f32 %v1688, %v1689
        %v1691 = vsel %vm183, %v1590, 0.0
        %v1692 = vadd.f32 %v1690, %v1691
        %v1693 = vsel %vm183, %v1593, 0.0
        %v1694 = vadd.f32 %v1692, %v1693
        %v1695 = vsel %vm183, %v1598, 0.0
        %v1696 = vadd.f32 %v1694, %v1695
        %v1697 = vsel %vm183, %v1601, 0.0
        %v1698 = vadd.f32 %v1696, %v1697
        %v1699 = vrot.slane %v1698, 4
        %v1700 = vadd.f32 %v1698, %v1699
        %v1701 = vrot.slane %v1700, 2
        %v1702 = vadd.f32 %v1700, %v1701
        %v1703 = vrot.slane %v1702, 1
        %v1704 = vadd.f32 %v1702, %v1703
        %v1705 = vmul.f32 %v1478, %v1478
        %v1706 = vmul.f32 %v1481, %v1481
        %v1707 = vmul.f32 %v1486, %v1486
        %v1708 = vmul.f32 %v1489, %v1489
        %v1709 = vmul.f32 %v1494, %v1494
        %v1710 = vmul.f32 %v1497, %v1497
        %v1711 = vmul.f32 %v1502, %v1502
        %v1712 = vmul.f32 %v1505, %v1505
        %v1713 = vmul.f32 %v1510, %v1510
        %v1714 = vmul.f32 %v1513, %v1513
        %v1715 = vmul.f32 %v1518, %v1518
        %v1716 = vmul.f32 %v1521, %v1521
        %v1717 = vmul.f32 %v1526, %v1526
        %v1718 = vmul.f32 %v1529, %v1529
        %v1719 = vmul.f32 %v1534, %v1534
        %v1720 = vmul.f32 %v1537, %v1537
        %v1721 = vmul.f32 %v1542, %v1542
        %v1722 = vmul.f32 %v1545, %v1545
        %v1723 = vmul.f32 %v1550, %v1550
        %v1724 = vmul.f32 %v1553, %v1553
        %v1725 = vmul.f32 %v1558, %v1558
        %v1726 = vmul.f32 %v1561, %v1561
        %v1727 = vmul.f32 %v1566, %v1566
        %v1728 = vmul.f32 %v1569, %v1569
        %v1729 = vmul.f32 %v1574, %v1574
        %v1730 = vmul.f32 %v1577, %v1577
        %v1731 = vmul.f32 %v1582, %v1582
        %v1732 = vmul.f32 %v1585, %v1585
        %v1733 = vmul.f32 %v1590, %v1590
        %v1734 = vmul.f32 %v1593, %v1593
        %v1735 = vmul.f32 %v1598, %v1598
        %v1736 = vmul.f32 %v1601, %v1601
        %v1737 = vsel %vm183, %v1705, 0.0
        %v1738 = vsel %vm183, %v1706, 0.0
        %v1739 = vadd.f32 %v1737, %v1738
        %v1740 = vsel %vm183, %v1707, 0.0
        %v1741 = vadd.f32 %v1739, %v1740
        %v1742 = vsel %vm183, %v1708, 0.0
        %v1743 = vadd.f32 %v1741, %v1742
        %v1744 = vsel %vm183, %v1709, 0.0
        %v1745 = vadd.f32 %v1743, %v1744
        %v1746 = vsel %vm183, %v1710, 0.0
        %v1747 = vadd.f32 %v1745, %v1746
        %v1748 = vsel %vm183, %v1711, 0.0
        %v1749 = vadd.f32 %v1747, %v1748
        %v1750 = vsel %vm183, %v1712, 0.0
        %v1751 = vadd.f32 %v1749, %v1750
        %v1752 = vsel %vm183, %v1713, 0.0
        %v1753 = vadd.f32 %v1751, %v1752
        %v1754 = vsel %vm183, %v1714, 0.0
        %v1755 = vadd.f32 %v1753, %v1754
        %v1756 = vsel %vm183, %v1715, 0.0
        %v1757 = vadd.f32 %v1755, %v1756
        %v1758 = vsel %vm183, %v1716, 0.0
        %v1759 = vadd.f32 %v1757, %v1758
        %v1760 = vsel %vm183, %v1717, 0.0
        %v1761 = vadd.f32 %v1759, %v1760
        %v1762 = vsel %vm183, %v1718, 0.0
        %v1763 = vadd.f32 %v1761, %v1762
        %v1764 = vsel %vm183, %v1719, 0.0
        %v1765 = vadd.f32 %v1763, %v1764
        %v1766 = vsel %vm183, %v1720, 0.0
        %v1767 = vadd.f32 %v1765, %v1766
        %v1768 = vsel %vm183, %v1721, 0.0
        %v1769 = vadd.f32 %v1767, %v1768
        %v1770 = vsel %vm183, %v1722, 0.0
        %v1771 = vadd.f32 %v1769, %v1770
        %v1772 = vsel %vm183, %v1723, 0.0
        %v1773 = vadd.f32 %v1771, %v1772
        %v1774 = vsel %vm183, %v1724, 0.0
        %v1775 = vadd.f32 %v1773, %v1774
        %v1776 = vsel %vm183, %v1725, 0.0
        %v1777 = vadd.f32 %v1775, %v1776
        %v1778 = vsel %vm183, %v1726, 0.0
        %v1779 = vadd.f32 %v1777, %v1778
        %v1780 = vsel %vm183, %v1727, 0.0
        %v1781 = vadd.f32 %v1779, %v1780
        %v1782 = vsel %vm183, %v1728, 0.0
        %v1783 = vadd.f32 %v1781, %v1782
        %v1784 = vsel %vm183, %v1729, 0.0
        %v1785 = vadd.f32 %v1783, %v1784
        %v1786 = vsel %vm183, %v1730, 0.0
        %v1787 = vadd.f32 %v1785, %v1786
        %v1788 = vsel %vm183, %v1731, 0.0
        %v1789 = vadd.f32 %v1787, %v1788
        %v1790 = vsel %vm183, %v1732, 0.0
        %v1791 = vadd.f32 %v1789, %v1790
        %v1792 = vsel %vm183, %v1733, 0.0
        %v1793 = vadd.f32 %v1791, %v1792
        %v1794 = vsel %vm183, %v1734, 0.0
        %v1795 = vadd.f32 %v1793, %v1794
        %v1796 = vsel %vm183, %v1735, 0.0
        %v1797 = vadd.f32 %v1795, %v1796
        %v1798 = vsel %vm183, %v1736, 0.0
        %v1799 = vadd.f32 %v1797, %v1798
        %v1800 = vrot.slane %v1799, 4
        %v1801 = vadd.f32 %v1799, %v1800
        %v1802 = vrot.slane %v1801, 2
        %v1803 = vadd.f32 %v1801, %v1802
        %v1804 = vrot.slane %v1803, 1
        %v1805 = vadd.f32 %v1803, %v1804
        %vm1806 = vcmask 1040384
        %v1807 = vsel %vm1806, %v1704, %v1805
        %1808 = vst.msk [vmem:[%s171] sm:$0x3] %vm186, %v1807
        %p1809 = scmp.lt.s32.totalorder %s18, 1
        %s1810 = scalar_select %p1809, %s18, 1
        %s1811 = smul.addr %s1810, 32
        %s1812 = smul.addr %s1811, 8
        %s1813 = scalar_lea.vmem %s2, %s1812
        %s1814 = sand.u32 %s99, 1
        %s1815 = scalar_lea.sflag [#allocation4], %s1814
        %s1816 = sand.u32 %s99, 1
        %s1817 = smul.addr %s1816, 2
        %s1818 = scalar_lea.vmem [#allocation3], %s1817
        // Predicated region
        $region29: #{tpu_custom_call.1} parent=27 // pred_check
          %p1819 = pneg %p83
        $region30: #{tpu_custom_call.1} parent=27 // pred_check_branch
          %1821 = sbr.rel (%p1819) target = $region32
        $region31: #{tpu_custom_call.1} parent=27 // pred_region
          _
        $region32: #{tpu_custom_call.1} parent=27 // pred_fallthru
          _
        // Predicated region
        $region33: #{tpu_custom_call.1} parent=27 // pred_check
          %p1822 = pneg %p109
        $region34: #{tpu_custom_call.1} parent=27 // pred_check_branch
          %1824 = sbr.rel (%p1822) target = $region36
        $region35: #{tpu_custom_call.1} parent=27 // pred_region
          %s1826 = ssub.s32 32, 32
          %1827 = vsyncadd %s1815, %s1826
          %s1828 = smul.addr %s18, 32
          %s1829 = scalar_lea.hbm %s3, %s1828
          %s1831 = sshll.u32 %s1818, 4
          %s1832 = int_to_ptr.vmem [resolvable:$true] %s1831
          %1834 = dma.vmem_to_hbm [thread:$0]  %s1832, 32, %s1829, %s1815
        $region36: #{tpu_custom_call.1} parent=27 // pred_fallthru
          _
      $region28: #{tpu_custom_call.1} parent=5 // pred_fallthru
        _
      %p1835 = scmp.le.s32.totalorder 2, %s13
      // Predicated region
      $region37: #{tpu_custom_call.1} parent=5 // pred_check
        %p1836 = pneg %p1835
      $region38: #{tpu_custom_call.1} parent=5 // pred_check_branch
        %1838 = sbr.rel (%p1836) target = $region40
      $region39: #{tpu_custom_call.1} parent=5 // pred_region
        %s1839 = ssub.s32 %s13, 2
        // Predicated region
        $region41: #{tpu_custom_call.1} parent=39 // pred_check
          %p1840 = pneg %p89
        $region42: #{tpu_custom_call.1} parent=39 // pred_check_branch
          %1842 = sbr.rel (%p1840) target = $region44
        $region43: #{tpu_custom_call.1} parent=39 // pred_region
          %p1843 = scmp.lt.s32.totalorder %s19, 1
          %s1844 = scalar_select %p1843, %s19, 1
          %s1845 = smul.addr %s1844, 32
          %s1846 = smul.addr %s1845, 8
          %s1847 = scalar_lea.vmem %s2, %s1846
        $region44: #{tpu_custom_call.1} parent=39 // pred_fallthru
          _
        // Predicated region
        $region45: #{tpu_custom_call.1} parent=39 // pred_check
          %p1848 = pneg %p115
        $region46: #{tpu_custom_call.1} parent=39 // pred_check_branch
          %1850 = sbr.rel (%p1848) target = $region48
        $region47: #{tpu_custom_call.1} parent=39 // pred_region
          %s1851 = sand.u32 %s100, 1
          %s1852 = scalar_lea.sflag [#allocation4], %s1851
          %s1853 = sand.u32 %s100, 1
          %s1854 = smul.addr %s1853, 2
          %s1855 = scalar_lea.vmem [#allocation3], %s1854
          %1856 = dma.done %s1852, 32
        $region48: #{tpu_custom_call.1} parent=39 // pred_fallthru
          _
      $region40: #{tpu_custom_call.1} parent=5 // pred_fallthru
        _
    $region6: #{tpu_custom_call.1} parent=1 // loop_footer
      %s17 = sadd.s32 1, %s13
    $region7: #{tpu_custom_call.1} parent=1 // loop_footer_branch
      %12 = sbr.rel target = $region3
    $region8: #{tpu_custom_call.1} parent=1 // loop_exit
      _
    %1857 = vsyncpa [#allocation4], 1
    %s1858 = scalar_lea.sflag [#allocation4], 1
    %1859 = vsyncpa %s1858, 1

</llo_original>
